<compile_context>
chip_gen: v6e
topology: v6e:2x2x1
jax: 0.10.0
libtpu: 0.0.40
codegen_flags: <defaults>
</compile_context>

<pallas_src>
import math
import functools

import jax
import jax.numpy as jnp
import numpy as np
from jax.experimental import pallas as pl
from jax.experimental.pallas import tpu as pltpu


CFG = dict(
    vocabSize=256,
    contextLength=16,
    embeddingDims=32,
    numHeads=4,
    numLayers=2,
    dropRate=0.0,      # dropout is identity at rate 0
    qkvBias=False,
)


# ---------------------------------------------------------------------------
# In-kernel helpers (all f32 on the VPU)
# ---------------------------------------------------------------------------
def _layernorm(x, g, s, eps=1e-5):
    # matches LayerNorm: mean / biased var over last dim, then scale & shift
    mean = jnp.mean(x, axis=-1, keepdims=True)
    var = jnp.mean((x - mean) ** 2, axis=-1, keepdims=True)
    return g * ((x - mean) * jax.lax.rsqrt(var + eps)) + s


def _gelu(x):
    # TransformerBlock.GELU (tanh approximation)
    return 0.5 * x * (1.0 + jnp.tanh(jnp.sqrt(2.0 / jnp.pi) * (x + 0.044715 * x ** 3)))


# ---------------------------------------------------------------------------
# Fused forward kernel.  grid = (B, L):
#   axis 0 (parallel)   : one batch element (S token rows) per step
#   axis 1 (arbitrary)  : transformer layer, activation carried in VMEM scratch
# ---------------------------------------------------------------------------
def gpt_kernel(ids_ref,    # SMEM (B, S) int32  -- scalar prefetch
               tok_ref,    # (V, D)  f32 token embedding table
               pos_ref,    # (S, D)  f32 positional embeddings (rows [0, S))
               wqkv_ref,   # (1, D, 3D) fused Q/K/V weights of layer l
               wo_ref,     # (1, D, D)
               w1_ref,     # (1, D, 4D)
               w2_ref,     # (1, 4D, D)
               vec_ref,    # (1, 6, D) f32 [g1, s1, g2, s2, bo, b2]
               b1_ref,     # (1, 1, 4D) f32
               fin_ref,    # (2, D) f32 final LN [gF, sF]
               wout_ref,   # (D, V) LM head
               o_ref,      # (S, V) f32 logits for this batch element
               x_sc,       # VMEM scratch (S, D) f32 -- residual stream carry
               *, seq, num_heads, compute_dtype):
    b = pl.program_id(0)
    l = pl.program_id(1)
    S, D = x_sc.shape
    H = num_heads
    hd = D // H
    inv_scale = 1.0 / math.sqrt(hd)
    cdt = compute_dtype
    approx = cdt != jnp.float32   # EUP reciprocal unless exact f32 matching wanted

    # ---- first layer step only: fused embedding gather + positional add ----
    @pl.when(l == 0)
    def _init():
        rows = []
        for s in range(seq):                       # static unroll, S small
            tid = ids_ref[b, s]                    # SMEM scalar read
            rows.append(tok_ref[pl.ds(tid, 1), :]) # dynamic row gather from VMEM
        x_sc[...] = jnp.concatenate(rows, axis=0) + pos_ref[...]
        # dropoutEmbeddings: dropRate = 0.0 -> identity

    # ---- transformer block l ----
    x = x_sc[...]                                   # (S, D) f32 residual stream
    vecs = vec_ref[0]                               # (6, D)
    g1, s1 = vecs[0:1], vecs[1:2]
    g2, s2 = vecs[2:3], vecs[3:4]
    bo, b2 = vecs[4:5], vecs[5:6]
    b1 = b1_ref[0]                                  # (1, 4D)

    # attention sublayer: x + Attn(LN1(x))
    xn = _layernorm(x, g1, s1)
    qkv = jnp.dot(xn.astype(cdt), wqkv_ref[0],
                  preferred_element_type=jnp.float32)          # (S, 3D) f32 acc
    q, k, v = qkv[:, :D], qkv[:, D:2 * D], qkv[:, 2 * D:]

    qrow = jax.lax.broadcasted_iota(jnp.int32, (S, S), 0)
    kcol = jax.lax.broadcasted_iota(jnp.int32, (S, S), 1)
    causal = kcol <= qrow                                      # (S, S) mask only

    # per-head attention (static loop over H); softmax stats are per row,
    # per head, in f32.  For large configs use a head-batched dot_general or
    # a head grid axis instead of the static loop.
    ctx_heads = []
    for h in range(H):
        qh = q[:, h * hd:(h + 1) * hd].astype(cdt)
        kh = k[:, h * hd:(h + 1) * hd].astype(cdt)
        vh = v[:, h * hd:(h + 1) * hd].astype(cdt)
        sc = jax.lax.dot_general(qh, kh, dimension_numbers=(((1,), (1,)), ((), ())),
                                 preferred_element_type=jnp.float32) * inv_scale
        sc = jnp.where(causal, sc, -1e30)
        m = jnp.max(sc, axis=-1, keepdims=True)                # per-row/per-head max
        e = jnp.exp(sc - m)
        denom = jnp.sum(e, axis=-1, keepdims=True)
        attn = e * pl.reciprocal(denom, approx=approx)
        ctx_heads.append(jnp.dot(attn.astype(cdt), vh,
                                 preferred_element_type=jnp.float32))
    ctx = jnp.concatenate(ctx_heads, axis=1)                   # (S, D) f32
    att_out = jnp.dot(ctx.astype(cdt), wo_ref[0],
                      preferred_element_type=jnp.float32) + bo
    x = x + att_out                                            # dropShortcut: identity

    # feed-forward sublayer: x + MLP(LN2(x))
    xn2 = _layernorm(x, g2, s2)
    h1 = jnp.dot(xn2.astype(cdt), w1_ref[0],
                 preferred_element_type=jnp.float32) + b1
    ff = jnp.dot(_gelu(h1).astype(cdt), w2_ref[0],
                 preferred_element_type=jnp.float32) + b2
    x = x + ff
    x_sc[...] = x

    # ---- last layer step only: final LayerNorm + LM head ----
    @pl.when(l == pl.num_programs(1) - 1)
    def _final():
        fin = fin_ref[...]
        xn_f = _layernorm(x_sc[...], fin[0:1], fin[1:2])
        # TODO(synk): vocab-tile this matmul (and wout_ref / o_ref BlockSpecs)
        # for real vocab sizes; V=256 is a single lane-dense block.
        o_ref[...] = jnp.dot(xn_f.astype(cdt), wout_ref[...],
                             preferred_element_type=jnp.float32)


# ---------------------------------------------------------------------------
# Parameter packing (per-layer stacking; weights cast to the MXU dtype)
# ---------------------------------------------------------------------------
def pack_params(params, compute_dtype):
    blocks = params['blocks']
    wqkv = jnp.stack([jnp.concatenate([b['wq'], b['wk'], b['wv']], axis=1)
                      for b in blocks]).astype(compute_dtype)
    wo = jnp.stack([b['wo'] for b in blocks]).astype(compute_dtype)
    w1 = jnp.stack([b['w1'] for b in blocks]).astype(compute_dtype)
    w2 = jnp.stack([b['w2'] for b in blocks]).astype(compute_dtype)
    # LN gains/shifts and biases stay f32 (added / applied in f32 on the VPU)
    vec_d = jnp.stack([jnp.concatenate(
        [b['g1'], b['s1'], b['g2'], b['s2'], b['bo'], b['b2']], axis=0)
        for b in blocks])
    b1 = jnp.stack([b['b1'] for b in blocks])
    fin = jnp.concatenate([params['gF'], params['sF']], axis=0)
    wout = params['wout'].astype(compute_dtype)
    return dict(wqkv=wqkv, wo=wo, w1=w1, w2=w2, vec_d=vec_d, b1=b1,
                fin=fin, wout=wout)


# ---------------------------------------------------------------------------
# Wrapper
# ---------------------------------------------------------------------------
def gpt_forward(inputs, params, cfg, compute_dtype=jnp.bfloat16):
    """inputs: int32 [B, S] token ids. Returns float32 logits [B, S, vocab]."""
    B, S = inputs.shape
    D = cfg['embeddingDims']
    V = cfg['vocabSize']
    C = cfg['contextLength']
    L = cfg['numLayers']
    H4 = 4 * D
    assert S % 8 == 0 and S <= C, "seq must be a multiple of 8 sublanes and <= contextLength"

    kp = pack_params(params, compute_dtype)
    ids = inputs.astype(jnp.int32)

    kernel = functools.partial(gpt_kernel, seq=S, num_heads=cfg['numHeads'],
                               compute_dtype=compute_dtype)

    grid_spec = pltpu.PrefetchScalarGridSpec(
        num_scalar_prefetch=1,          # token ids -> SMEM, used for in-kernel gather
        grid=(B, L),
        in_specs=[
            pl.BlockSpec((V, D), lambda b, l, ids: (0, 0)),            # tok_emb
            pl.BlockSpec((S, D), lambda b, l, ids: (0, 0)),            # pos_emb rows [0,S)
            pl.BlockSpec((1, D, 3 * D), lambda b, l, ids: (l, 0, 0)),  # wqkv[l]
            pl.BlockSpec((1, D, D), lambda b, l, ids: (l, 0, 0)),      # wo[l]
            pl.BlockSpec((1, D, H4), lambda b, l, ids: (l, 0, 0)),     # w1[l]
            pl.BlockSpec((1, H4, D), lambda b, l, ids: (l, 0, 0)),     # w2[l]
            pl.BlockSpec((1, 6, D), lambda b, l, ids: (l, 0, 0)),      # LN/bias vecs[l]
            pl.BlockSpec((1, 1, H4), lambda b, l, ids: (l, 0, 0)),     # b1[l]
            pl.BlockSpec((2, D), lambda b, l, ids: (0, 0)),            # final LN
            pl.BlockSpec((D, V), lambda b, l, ids: (0, 0)),            # LM head
        ],
        out_specs=pl.BlockSpec((S, V), lambda b, l, ids: (b, 0)),      # lane-dense
        scratch_shapes=[pltpu.VMEM((S, D), jnp.float32)],              # residual carry
    )

    logits_flat = pl.pallas_call(
        kernel,
        out_shape=jax.ShapeDtypeStruct((B * S, V), jnp.float32),
        grid_spec=grid_spec,
        compiler_params=pltpu.CompilerParams(
            dimension_semantics=("parallel", "arbitrary"),
            vmem_limit_bytes=32 * 1024 * 1024),
    )(ids, params['tok_emb'], params['pos_emb'], kp['wqkv'], kp['wo'],
      kp['w1'], kp['w2'], kp['vec_d'], kp['b1'], kp['fin'], kp['wout'])
    return logits_flat.reshape(B, S, V)


# ---------------------------------------------------------------------------
# Deterministic parameter init (synthetic; shapes from GPTModel.__init__)
# ---------------------------------------------------------------------------
def init_params(key, cfg):
    D = cfg['embeddingDims']
    V = cfg['vocabSize']
    C = cfg['contextLength']
    H = 4 * D
    L = cfg['numLayers']

    def nrm(k, shape, scale=0.02):
        return scale * jax.random.normal(k, shape, dtype=jnp.float32)

    keys = jax.random.split(key, 3 + L)
    params = dict(
        tok_emb=nrm(keys[0], (V, D), 1.0),
        pos_emb=nrm(keys[1], (C, D), 1.0),
        wout=nrm(keys[2], (D, V)),                 # outHead (no bias)
        gF=jnp.ones((1, D), jnp.float32),
        sF=jnp.zeros((1, D), jnp.float32),
        blocks=[],
    )
    for l in range(L):
        bk = jax.random.split(keys[3 + l], 8)
        params['blocks'].append(dict(
            wq=nrm(bk[0], (D, D)), wk=nrm(bk[1], (D, D)), wv=nrm(bk[2], (D, D)),
            wo=nrm(bk[3], (D, D)), bo=jnp.zeros((1, D), jnp.float32),
            w1=nrm(bk[4], (D, H)), b1=nrm(bk[5], (1, H)),
            w2=nrm(bk[6], (H, D)), b2=nrm(bk[7], (1, D)),
            g1=jnp.ones((1, D), jnp.float32), s1=jnp.zeros((1, D), jnp.float32),
            g2=jnp.ones((1, D), jnp.float32), s2=jnp.zeros((1, D), jnp.float32),
        ))
    return params


# ---------------------------------------------------------------------------
# Pure-JAX reference (mirrors the PyTorch forward exactly) for validation
# ---------------------------------------------------------------------------
def _ref_ln(x, g, s, eps=1e-5):
    mean = jnp.mean(x, axis=-1, keepdims=True)
    var = jnp.mean((x - mean) ** 2, axis=-1, keepdims=True)
    return g * (x - mean) / jnp.sqrt(var + eps) + s


def ref_forward(inputs, params, cfg):
    D = cfg['embeddingDims']
    nh = cfg['numHeads']
    hd = D // nh
    B, S = inputs.shape
    x = jnp.take(params['tok_emb'], inputs, axis=0) + params['pos_emb'][:S]
    mask = jnp.tril(jnp.ones((S, S), dtype=bool))
    for p in params['blocks']:
        xn = _ref_ln(x, p['g1'], p['s1'])
        q = (xn @ p['wq']).reshape(B, S, nh, hd).transpose(0, 2, 1, 3)
        k = (xn @ p['wk']).reshape(B, S, nh, hd).transpose(0, 2, 1, 3)
        v = (xn @ p['wv']).reshape(B, S, nh, hd).transpose(0, 2, 1, 3)
        scores = jnp.einsum('bhqd,bhkd->bhqk', q, k) / math.sqrt(hd)
        scores = jnp.where(mask, scores, -jnp.inf)
        attn = jax.nn.softmax(scores, axis=-1)
        ctx = jnp.einsum('bhqk,bhkd->bhqd', attn, v).transpose(0, 2, 1, 3).reshape(B, S, D)
        x = x + (ctx @ p['wo'] + p['bo'])
        xn2 = _ref_ln(x, p['g2'], p['s2'])
        h = xn2 @ p['w1'] + p['b1']
        hg = 0.5 * h * (1.0 + jnp.tanh(jnp.sqrt(2.0 / jnp.pi) * (h + 0.044715 * h ** 3)))
        x = x + (hg @ p['w2'] + p['b2'])
    xn = _ref_ln(x, params['gF'], params['sF'])
    return xn @ params['wout']


if __name__ == "__main__":
    key = jax.random.PRNGKey(0)
    k_params, k_inputs = jax.random.split(key)

    params = init_params(k_params, CFG)

    batch, seq = 2, 8
    inputs = jax.random.randint(k_inputs, (batch, seq), 0, CFG['vocabSize'], dtype=jnp.int32)

    ref = jax.block_until_ready(ref_forward(inputs, params, CFG))

    # f32 MXU-operand path: exact check against the f32 reference
    logits_f32 = jax.block_until_ready(
        gpt_forward(inputs, params, CFG, compute_dtype=jnp.float32))
    np.testing.assert_allclose(np.asarray(logits_f32), np.asarray(ref),
                               rtol=1e-5, atol=1e-5)

    # bf16 MXU-operand path (f32 accumulation / stats): loose tolerance
    logits_bf16 = jax.block_until_ready(
        gpt_forward(inputs, params, CFG, compute_dtype=jnp.bfloat16))
    np.testing.assert_allclose(np.asarray(logits_bf16), np.asarray(ref),
                               rtol=5e-2, atol=5e-2)

    assert logits_f32.shape == (batch, seq, CFG['vocabSize'])
    print("KERNEL_OK")
</pallas_src>

<mosaic_0001>
module attributes {stable_mosaic.version = 11 : i64} {
  func.func @gpt_kernel(%arg0: i32, %arg1: i32, %arg2: memref<2x8xi32, #tpu.memory_space<smem>>, %arg3: memref<256x32xf32, #tpu.memory_space<vmem>>, %arg4: memref<8x32xf32, #tpu.memory_space<vmem>>, %arg5: memref<1x32x96xf32, #tpu.memory_space<vmem>>, %arg6: memref<1x32x32xf32, #tpu.memory_space<vmem>>, %arg7: memref<1x32x128xf32, #tpu.memory_space<vmem>>, %arg8: memref<1x128x32xf32, #tpu.memory_space<vmem>>, %arg9: memref<1x6x32xf32, #tpu.memory_space<vmem>>, %arg10: memref<1x1x128xf32, #tpu.memory_space<vmem>>, %arg11: memref<2x32xf32, #tpu.memory_space<vmem>>, %arg12: memref<32x256xf32, #tpu.memory_space<vmem>>, %arg13: memref<8x256xf32, #tpu.memory_space<vmem>>, %arg14: memref<8x32xf32, #tpu.memory_space<vmem>>) attributes {dimension_semantics = [#tpu.dimension_semantics<parallel>, #tpu.dimension_semantics<arbitrary>], iteration_bounds = array<i64: 2, 2>, scalar_prefetch = 1 : i64, scratch_operands = 1 : i64, tpu.core_type = #tpu.core_type<tc>, window_params = [{pipeline_mode = #tpu.pipeline_mode<synchronous>, transform_indices = @transform_0, window_bounds = array<i64: 256, 32>}, {transform_indices = @transform_1, window_bounds = array<i64: 8, 32>}, {transform_indices = @transform_2, window_bounds = array<i64: 1, 32, 96>}, {transform_indices = @transform_3, window_bounds = array<i64: 1, 32, 32>}, {transform_indices = @transform_4, window_bounds = array<i64: 1, 32, 128>}, {transform_indices = @transform_5, window_bounds = array<i64: 1, 128, 32>}, {transform_indices = @transform_6, window_bounds = array<i64: 1, 6, 32>}, {transform_indices = @transform_7, window_bounds = array<i64: 1, 1, 128>}, {pipeline_mode = #tpu.pipeline_mode<synchronous>, transform_indices = @transform_8, window_bounds = array<i64: 2, 32>}, {pipeline_mode = #tpu.pipeline_mode<synchronous>, transform_indices = @transform_9, window_bounds = array<i64: 32, 256>}, {transform_indices = @transform_10, window_bounds = array<i64: 8, 256>}]} {
    %c0_i32 = arith.constant 0 : i32
    %0 = arith.cmpi eq, %arg1, %c0_i32 : i32
    %1 = arith.extui %0 : i1 to i32
    %c0_i32_0 = arith.constant 0 : i32
    %2 = arith.cmpi ne, %1, %c0_i32_0 : i32
    scf.if %2 {
      %179 = arith.index_cast %arg0 : i32 to index
      %c0_64 = arith.constant 0 : index
      %180 = memref.load %arg2[%179, %c0_64] : memref<2x8xi32, #tpu.memory_space<smem>>
      %181 = arith.index_cast %180 : i32 to index
      %c0_65 = arith.constant 0 : index
      %182 = vector.load %arg3[%181, %c0_65] : memref<256x32xf32, #tpu.memory_space<vmem>>, vector<1x32xf32>
      %183 = arith.index_cast %arg0 : i32 to index
      %c1 = arith.constant 1 : index
      %184 = memref.load %arg2[%183, %c1] : memref<2x8xi32, #tpu.memory_space<smem>>
      %185 = arith.index_cast %184 : i32 to index
      %c0_66 = arith.constant 0 : index
      %186 = vector.load %arg3[%185, %c0_66] : memref<256x32xf32, #tpu.memory_space<vmem>>, vector<1x32xf32>
      %187 = arith.index_cast %arg0 : i32 to index
      %c2 = arith.constant 2 : index
      %188 = memref.load %arg2[%187, %c2] : memref<2x8xi32, #tpu.memory_space<smem>>
      %189 = arith.index_cast %188 : i32 to index
      %c0_67 = arith.constant 0 : index
      %190 = vector.load %arg3[%189, %c0_67] : memref<256x32xf32, #tpu.memory_space<vmem>>, vector<1x32xf32>
      %191 = arith.index_cast %arg0 : i32 to index
      %c3 = arith.constant 3 : index
      %192 = memref.load %arg2[%191, %c3] : memref<2x8xi32, #tpu.memory_space<smem>>
      %193 = arith.index_cast %192 : i32 to index
      %c0_68 = arith.constant 0 : index
      %194 = vector.load %arg3[%193, %c0_68] : memref<256x32xf32, #tpu.memory_space<vmem>>, vector<1x32xf32>
      %195 = arith.index_cast %arg0 : i32 to index
      %c4 = arith.constant 4 : index
      %196 = memref.load %arg2[%195, %c4] : memref<2x8xi32, #tpu.memory_space<smem>>
      %197 = arith.index_cast %196 : i32 to index
      %c0_69 = arith.constant 0 : index
      %198 = vector.load %arg3[%197, %c0_69] : memref<256x32xf32, #tpu.memory_space<vmem>>, vector<1x32xf32>
      %199 = arith.index_cast %arg0 : i32 to index
      %c5 = arith.constant 5 : index
      %200 = memref.load %arg2[%199, %c5] : memref<2x8xi32, #tpu.memory_space<smem>>
      %201 = arith.index_cast %200 : i32 to index
      %c0_70 = arith.constant 0 : index
      %202 = vector.load %arg3[%201, %c0_70] : memref<256x32xf32, #tpu.memory_space<vmem>>, vector<1x32xf32>
      %203 = arith.index_cast %arg0 : i32 to index
      %c6 = arith.constant 6 : index
      %204 = memref.load %arg2[%203, %c6] : memref<2x8xi32, #tpu.memory_space<smem>>
      %205 = arith.index_cast %204 : i32 to index
      %c0_71 = arith.constant 0 : index
      %206 = vector.load %arg3[%205, %c0_71] : memref<256x32xf32, #tpu.memory_space<vmem>>, vector<1x32xf32>
      %207 = arith.index_cast %arg0 : i32 to index
      %c7 = arith.constant 7 : index
      %208 = memref.load %arg2[%207, %c7] : memref<2x8xi32, #tpu.memory_space<smem>>
      %209 = arith.index_cast %208 : i32 to index
      %c0_72 = arith.constant 0 : index
      %210 = vector.load %arg3[%209, %c0_72] : memref<256x32xf32, #tpu.memory_space<vmem>>, vector<1x32xf32>
      %211 = tpu.concatenate %182, %186, %190, %194, %198, %202, %206, %210 in 0 : vector<1x32xf32>, vector<1x32xf32>, vector<1x32xf32>, vector<1x32xf32>, vector<1x32xf32>, vector<1x32xf32>, vector<1x32xf32>, vector<1x32xf32> -> vector<8x32xf32>
      %c0_73 = arith.constant 0 : index
      %c0_74 = arith.constant 0 : index
      %212 = vector.load %arg4[%c0_73, %c0_74] : memref<8x32xf32, #tpu.memory_space<vmem>>, vector<8x32xf32>
      %213 = arith.addf %211, %212 : vector<8x32xf32>
      %c0_75 = arith.constant 0 : index
      %c0_76 = arith.constant 0 : index
      %214 = vector.load %arg14[%c0_75, %c0_76] : memref<8x32xf32, #tpu.memory_space<vmem>>, vector<8x32xf32>
      tpu.vector_store %arg14[%c0_75, %c0_76], %213 {strides = array<i32>} : memref<8x32xf32, #tpu.memory_space<vmem>>, vector<8x32xf32>,
    } else {
    }
    %c0 = arith.constant 0 : index
    %c0_1 = arith.constant 0 : index
    %3 = vector.load %arg14[%c0, %c0_1] : memref<8x32xf32, #tpu.memory_space<vmem>>, vector<8x32xf32>
    %c0_2 = arith.constant 0 : index
    %c0_3 = arith.constant 0 : index
    %c0_4 = arith.constant 0 : index
    %4 = vector.load %arg9[%c0_2, %c0_3, %c0_4] : memref<1x6x32xf32, #tpu.memory_space<vmem>>, vector<1x6x32xf32>
    %5 = vector.shape_cast %4 : vector<1x6x32xf32> to vector<6x32xf32>
    %6 = vector.extract_strided_slice %5 {offsets = [0, 0], sizes = [1, 32], strides = [1, 1]} : vector<6x32xf32> to vector<1x32xf32>
    %7 = vector.extract_strided_slice %5 {offsets = [1, 0], sizes = [1, 32], strides = [1, 1]} : vector<6x32xf32> to vector<1x32xf32>
    %8 = vector.extract_strided_slice %5 {offsets = [2, 0], sizes = [1, 32], strides = [1, 1]} : vector<6x32xf32> to vector<1x32xf32>
    %9 = vector.extract_strided_slice %5 {offsets = [3, 0], sizes = [1, 32], strides = [1, 1]} : vector<6x32xf32> to vector<1x32xf32>
    %10 = vector.extract_strided_slice %5 {offsets = [4, 0], sizes = [1, 32], strides = [1, 1]} : vector<6x32xf32> to vector<1x32xf32>
    %11 = vector.extract_strided_slice %5 {offsets = [5, 0], sizes = [1, 32], strides = [1, 1]} : vector<6x32xf32> to vector<1x32xf32>
    %c0_5 = arith.constant 0 : index
    %c0_6 = arith.constant 0 : index
    %c0_7 = arith.constant 0 : index
    %12 = vector.load %arg10[%c0_5, %c0_6, %c0_7] : memref<1x1x128xf32, #tpu.memory_space<vmem>>, vector<1x1x128xf32>
    %13 = vector.shape_cast %12 : vector<1x1x128xf32> to vector<1x128xf32>
    %cst = arith.constant dense<0.000000e+00> : vector<8xf32>
    %14 = vector.multi_reduction <add>, %3, %cst [1] : vector<8x32xf32> to vector<8xf32>
    %15 = vector.shape_cast %14 : vector<8xf32> to vector<8x1xf32>
    %cst_8 = arith.constant 3.200000e+01 : f32
    %16 = vector.broadcast %cst_8 : f32 to vector<8x1xf32>
    %17 = arith.divf %15, %16 : vector<8x1xf32>
    %18 = vector.broadcast %17 : vector<8x1xf32> to vector<8x32xf32>
    %19 = arith.subf %3, %18 : vector<8x32xf32>
    %20 = arith.mulf %19, %19 : vector<8x32xf32>
    %cst_9 = arith.constant dense<0.000000e+00> : vector<8xf32>
    %21 = vector.multi_reduction <add>, %20, %cst_9 [1] : vector<8x32xf32> to vector<8xf32>
    %22 = vector.shape_cast %21 : vector<8xf32> to vector<8x1xf32>
    %cst_10 = arith.constant 3.200000e+01 : f32
    %23 = vector.broadcast %cst_10 : f32 to vector<8x1xf32>
    %24 = arith.divf %22, %23 : vector<8x1xf32>
    %25 = vector.broadcast %17 : vector<8x1xf32> to vector<8x32xf32>
    %26 = arith.subf %3, %25 : vector<8x32xf32>
    %cst_11 = arith.constant 9.99999974E-6 : f32
    %27 = vector.broadcast %cst_11 : f32 to vector<8x1xf32>
    %28 = arith.addf %24, %27 : vector<8x1xf32>
    %29 = math.rsqrt %28 : vector<8x1xf32>
    %30 = vector.broadcast %29 : vector<8x1xf32> to vector<8x32xf32>
    %31 = arith.mulf %26, %30 : vector<8x32xf32>
    %32 = vector.broadcast %6 : vector<1x32xf32> to vector<8x32xf32>
    %33 = arith.mulf %32, %31 : vector<8x32xf32>
    %34 = vector.broadcast %7 : vector<1x32xf32> to vector<8x32xf32>
    %35 = arith.addf %33, %34 : vector<8x32xf32>
    %c0_12 = arith.constant 0 : index
    %c0_13 = arith.constant 0 : index
    %c0_14 = arith.constant 0 : index
    %36 = vector.load %arg5[%c0_12, %c0_13, %c0_14] : memref<1x32x96xf32, #tpu.memory_space<vmem>>, vector<1x32x96xf32>
    %37 = vector.shape_cast %36 : vector<1x32x96xf32> to vector<32x96xf32>
    %cst_15 = arith.constant dense<0.000000e+00> : vector<8x96xf32>
    %38 = tpu.matmul %35, %37, %cst_15 {dimension_numbers = #tpu.dot_dimension_numbers<[1], [0], [0], [1], [0, 0, 1, 1], [], []>} : vector<8x32xf32>, vector<32x96xf32>, vector<8x96xf32> -> vector<8x96xf32>
    %39 = vector.extract_strided_slice %38 {offsets = [0, 0], sizes = [8, 32], strides = [1, 1]} : vector<8x96xf32> to vector<8x32xf32>
    %40 = vector.extract_strided_slice %38 {offsets = [0, 32], sizes = [8, 32], strides = [1, 1]} : vector<8x96xf32> to vector<8x32xf32>
    %41 = vector.extract_strided_slice %38 {offsets = [0, 64], sizes = [8, 32], strides = [1, 1]} : vector<8x96xf32> to vector<8x32xf32>
    %42 = tpu.iota {dimensions = array<i32: 0>} : vector<8x8xi32>
    %43 = tpu.iota {dimensions = array<i32: 1>} : vector<8x8xi32>
    %44 = arith.cmpi sle, %43, %42 : vector<8x8xi32>
    %45 = vector.extract_strided_slice %39 {offsets = [0, 0], sizes = [8, 8], strides = [1, 1]} : vector<8x32xf32> to vector<8x8xf32>
    %46 = vector.extract_strided_slice %40 {offsets = [0, 0], sizes = [8, 8], strides = [1, 1]} : vector<8x32xf32> to vector<8x8xf32>
    %47 = vector.extract_strided_slice %41 {offsets = [0, 0], sizes = [8, 8], strides = [1, 1]} : vector<8x32xf32> to vector<8x8xf32>
    %cst_16 = arith.constant dense<0.000000e+00> : vector<8x8xf32>
    %48 = tpu.matmul %45, %46, %cst_16 {dimension_numbers = #tpu.dot_dimension_numbers<[1], [1], [0], [0], [0, 0, 1, 0], [], []>} : vector<8x8xf32>, vector<8x8xf32>, vector<8x8xf32> -> vector<8x8xf32>
    %cst_17 = arith.constant 0.353553385 : f32
    %49 = vector.broadcast %cst_17 : f32 to vector<8x8xf32>
    %50 = arith.mulf %48, %49 : vector<8x8xf32>
    %cst_18 = arith.constant -1.000000e+30 : f32
    %51 = vector.broadcast %cst_18 : f32 to vector<8x8xf32>
    %52 = arith.select %44, %50, %51 : vector<8x8xi1>, vector<8x8xf32>
    %cst_19 = arith.constant dense<0xFF800000> : vector<8xf32>
    %53 = vector.multi_reduction <maximumf>, %52, %cst_19 [1] : vector<8x8xf32> to vector<8xf32>
    %54 = vector.shape_cast %53 : vector<8xf32> to vector<8x1xf32>
    %55 = vector.broadcast %54 : vector<8x1xf32> to vector<8x8xf32>
    %56 = arith.subf %52, %55 : vector<8x8xf32>
    %57 = math.exp %56 : vector<8x8xf32>
    %cst_20 = arith.constant dense<0.000000e+00> : vector<8xf32>
    %58 = vector.multi_reduction <add>, %57, %cst_20 [1] : vector<8x8xf32> to vector<8xf32>
    %59 = vector.shape_cast %58 : vector<8xf32> to vector<8x1xf32>
    %60 = tpu.reciprocal %59 : vector<8x1xf32> -> vector<8x1xf32>
    %61 = vector.broadcast %60 : vector<8x1xf32> to vector<8x8xf32>
    %62 = arith.mulf %57, %61 : vector<8x8xf32>
    %cst_21 = arith.constant dense<0.000000e+00> : vector<8x8xf32>
    %63 = tpu.matmul %62, %47, %cst_21 {dimension_numbers = #tpu.dot_dimension_numbers<[1], [0], [0], [1], [0, 0, 1, 1], [], []>} : vector<8x8xf32>, vector<8x8xf32>, vector<8x8xf32> -> vector<8x8xf32>
    %64 = vector.extract_strided_slice %39 {offsets = [0, 8], sizes = [8, 8], strides = [1, 1]} : vector<8x32xf32> to vector<8x8xf32>
    %65 = vector.extract_strided_slice %40 {offsets = [0, 8], sizes = [8, 8], strides = [1, 1]} : vector<8x32xf32> to vector<8x8xf32>
    %66 = vector.extract_strided_slice %41 {offsets = [0, 8], sizes = [8, 8], strides = [1, 1]} : vector<8x32xf32> to vector<8x8xf32>
    %cst_22 = arith.constant dense<0.000000e+00> : vector<8x8xf32>
    %67 = tpu.matmul %64, %65, %cst_22 {dimension_numbers = #tpu.dot_dimension_numbers<[1], [1], [0], [0], [0, 0, 1, 0], [], []>} : vector<8x8xf32>, vector<8x8xf32>, vector<8x8xf32> -> vector<8x8xf32>
    %cst_23 = arith.constant 0.353553385 : f32
    %68 = vector.broadcast %cst_23 : f32 to vector<8x8xf32>
    %69 = arith.mulf %67, %68 : vector<8x8xf32>
    %cst_24 = arith.constant -1.000000e+30 : f32
    %70 = vector.broadcast %cst_24 : f32 to vector<8x8xf32>
    %71 = arith.select %44, %69, %70 : vector<8x8xi1>, vector<8x8xf32>
    %cst_25 = arith.constant dense<0xFF800000> : vector<8xf32>
    %72 = vector.multi_reduction <maximumf>, %71, %cst_25 [1] : vector<8x8xf32> to vector<8xf32>
    %73 = vector.shape_cast %72 : vector<8xf32> to vector<8x1xf32>
    %74 = vector.broadcast %73 : vector<8x1xf32> to vector<8x8xf32>
    %75 = arith.subf %71, %74 : vector<8x8xf32>
    %76 = math.exp %75 : vector<8x8xf32>
    %cst_26 = arith.constant dense<0.000000e+00> : vector<8xf32>
    %77 = vector.multi_reduction <add>, %76, %cst_26 [1] : vector<8x8xf32> to vector<8xf32>
    %78 = vector.shape_cast %77 : vector<8xf32> to vector<8x1xf32>
    %79 = tpu.reciprocal %78 : vector<8x1xf32> -> vector<8x1xf32>
    %80 = vector.broadcast %79 : vector<8x1xf32> to vector<8x8xf32>
    %81 = arith.mulf %76, %80 : vector<8x8xf32>
    %cst_27 = arith.constant dense<0.000000e+00> : vector<8x8xf32>
    %82 = tpu.matmul %81, %66, %cst_27 {dimension_numbers = #tpu.dot_dimension_numbers<[1], [0], [0], [1], [0, 0, 1, 1], [], []>} : vector<8x8xf32>, vector<8x8xf32>, vector<8x8xf32> -> vector<8x8xf32>
    %83 = vector.extract_strided_slice %39 {offsets = [0, 16], sizes = [8, 8], strides = [1, 1]} : vector<8x32xf32> to vector<8x8xf32>
    %84 = vector.extract_strided_slice %40 {offsets = [0, 16], sizes = [8, 8], strides = [1, 1]} : vector<8x32xf32> to vector<8x8xf32>
    %85 = vector.extract_strided_slice %41 {offsets = [0, 16], sizes = [8, 8], strides = [1, 1]} : vector<8x32xf32> to vector<8x8xf32>
    %cst_28 = arith.constant dense<0.000000e+00> : vector<8x8xf32>
    %86 = tpu.matmul %83, %84, %cst_28 {dimension_numbers = #tpu.dot_dimension_numbers<[1], [1], [0], [0], [0, 0, 1, 0], [], []>} : vector<8x8xf32>, vector<8x8xf32>, vector<8x8xf32> -> vector<8x8xf32>
    %cst_29 = arith.constant 0.353553385 : f32
    %87 = vector.broadcast %cst_29 : f32 to vector<8x8xf32>
    %88 = arith.mulf %86, %87 : vector<8x8xf32>
    %cst_30 = arith.constant -1.000000e+30 : f32
    %89 = vector.broadcast %cst_30 : f32 to vector<8x8xf32>
    %90 = arith.select %44, %88, %89 : vector<8x8xi1>, vector<8x8xf32>
    %cst_31 = arith.constant dense<0xFF800000> : vector<8xf32>
    %91 = vector.multi_reduction <maximumf>, %90, %cst_31 [1] : vector<8x8xf32> to vector<8xf32>
    %92 = vector.shape_cast %91 : vector<8xf32> to vector<8x1xf32>
    %93 = vector.broadcast %92 : vector<8x1xf32> to vector<8x8xf32>
    %94 = arith.subf %90, %93 : vector<8x8xf32>
    %95 = math.exp %94 : vector<8x8xf32>
    %cst_32 = arith.constant dense<0.000000e+00> : vector<8xf32>
    %96 = vector.multi_reduction <add>, %95, %cst_32 [1] : vector<8x8xf32> to vector<8xf32>
    %97 = vector.shape_cast %96 : vector<8xf32> to vector<8x1xf32>
    %98 = tpu.reciprocal %97 : vector<8x1xf32> -> vector<8x1xf32>
    %99 = vector.broadcast %98 : vector<8x1xf32> to vector<8x8xf32>
    %100 = arith.mulf %95, %99 : vector<8x8xf32>
    %cst_33 = arith.constant dense<0.000000e+00> : vector<8x8xf32>
    %101 = tpu.matmul %100, %85, %cst_33 {dimension_numbers = #tpu.dot_dimension_numbers<[1], [0], [0], [1], [0, 0, 1, 1], [], []>} : vector<8x8xf32>, vector<8x8xf32>, vector<8x8xf32> -> vector<8x8xf32>
    %102 = vector.extract_strided_slice %39 {offsets = [0, 24], sizes = [8, 8], strides = [1, 1]} : vector<8x32xf32> to vector<8x8xf32>
    %103 = vector.extract_strided_slice %40 {offsets = [0, 24], sizes = [8, 8], strides = [1, 1]} : vector<8x32xf32> to vector<8x8xf32>
    %104 = vector.extract_strided_slice %41 {offsets = [0, 24], sizes = [8, 8], strides = [1, 1]} : vector<8x32xf32> to vector<8x8xf32>
    %cst_34 = arith.constant dense<0.000000e+00> : vector<8x8xf32>
    %105 = tpu.matmul %102, %103, %cst_34 {dimension_numbers = #tpu.dot_dimension_numbers<[1], [1], [0], [0], [0, 0, 1, 0], [], []>} : vector<8x8xf32>, vector<8x8xf32>, vector<8x8xf32> -> vector<8x8xf32>
    %cst_35 = arith.constant 0.353553385 : f32
    %106 = vector.broadcast %cst_35 : f32 to vector<8x8xf32>
    %107 = arith.mulf %105, %106 : vector<8x8xf32>
    %cst_36 = arith.constant -1.000000e+30 : f32
    %108 = vector.broadcast %cst_36 : f32 to vector<8x8xf32>
    %109 = arith.select %44, %107, %108 : vector<8x8xi1>, vector<8x8xf32>
    %cst_37 = arith.constant dense<0xFF800000> : vector<8xf32>
    %110 = vector.multi_reduction <maximumf>, %109, %cst_37 [1] : vector<8x8xf32> to vector<8xf32>
    %111 = vector.shape_cast %110 : vector<8xf32> to vector<8x1xf32>
    %112 = vector.broadcast %111 : vector<8x1xf32> to vector<8x8xf32>
    %113 = arith.subf %109, %112 : vector<8x8xf32>
    %114 = math.exp %113 : vector<8x8xf32>
    %cst_38 = arith.constant dense<0.000000e+00> : vector<8xf32>
    %115 = vector.multi_reduction <add>, %114, %cst_38 [1] : vector<8x8xf32> to vector<8xf32>
    %116 = vector.shape_cast %115 : vector<8xf32> to vector<8x1xf32>
    %117 = tpu.reciprocal %116 : vector<8x1xf32> -> vector<8x1xf32>
    %118 = vector.broadcast %117 : vector<8x1xf32> to vector<8x8xf32>
    %119 = arith.mulf %114, %118 : vector<8x8xf32>
    %cst_39 = arith.constant dense<0.000000e+00> : vector<8x8xf32>
    %120 = tpu.matmul %119, %104, %cst_39 {dimension_numbers = #tpu.dot_dimension_numbers<[1], [0], [0], [1], [0, 0, 1, 1], [], []>} : vector<8x8xf32>, vector<8x8xf32>, vector<8x8xf32> -> vector<8x8xf32>
    %121 = tpu.concatenate %63, %82, %101, %120 in 1 : vector<8x8xf32>, vector<8x8xf32>, vector<8x8xf32>, vector<8x8xf32> -> vector<8x32xf32>
    %c0_40 = arith.constant 0 : index
    %c0_41 = arith.constant 0 : index
    %c0_42 = arith.constant 0 : index
    %122 = vector.load %arg6[%c0_40, %c0_41, %c0_42] : memref<1x32x32xf32, #tpu.memory_space<vmem>>, vector<1x32x32xf32>
    %123 = vector.shape_cast %122 : vector<1x32x32xf32> to vector<32x32xf32>
    %cst_43 = arith.constant dense<0.000000e+00> : vector<8x32xf32>
    %124 = tpu.matmul %121, %123, %cst_43 {dimension_numbers = #tpu.dot_dimension_numbers<[1], [0], [0], [1], [0, 0, 1, 1], [], []>} : vector<8x32xf32>, vector<32x32xf32>, vector<8x32xf32> -> vector<8x32xf32>
    %125 = vector.broadcast %10 : vector<1x32xf32> to vector<8x32xf32>
    %126 = arith.addf %124, %125 : vector<8x32xf32>
    %127 = arith.addf %3, %126 : vector<8x32xf32>
    %cst_44 = arith.constant dense<0.000000e+00> : vector<8xf32>
    %128 = vector.multi_reduction <add>, %127, %cst_44 [1] : vector<8x32xf32> to vector<8xf32>
    %129 = vector.shape_cast %128 : vector<8xf32> to vector<8x1xf32>
    %cst_45 = arith.constant 3.200000e+01 : f32
    %130 = vector.broadcast %cst_45 : f32 to vector<8x1xf32>
    %131 = arith.divf %129, %130 : vector<8x1xf32>
    %132 = vector.broadcast %131 : vector<8x1xf32> to vector<8x32xf32>
    %133 = arith.subf %127, %132 : vector<8x32xf32>
    %134 = arith.mulf %133, %133 : vector<8x32xf32>
    %cst_46 = arith.constant dense<0.000000e+00> : vector<8xf32>
    %135 = vector.multi_reduction <add>, %134, %cst_46 [1] : vector<8x32xf32> to vector<8xf32>
    %136 = vector.shape_cast %135 : vector<8xf32> to vector<8x1xf32>
    %cst_47 = arith.constant 3.200000e+01 : f32
    %137 = vector.broadcast %cst_47 : f32 to vector<8x1xf32>
    %138 = arith.divf %136, %137 : vector<8x1xf32>
    %139 = vector.broadcast %131 : vector<8x1xf32> to vector<8x32xf32>
    %140 = arith.subf %127, %139 : vector<8x32xf32>
    %cst_48 = arith.constant 9.99999974E-6 : f32
    %141 = vector.broadcast %cst_48 : f32 to vector<8x1xf32>
    %142 = arith.addf %138, %141 : vector<8x1xf32>
    %143 = math.rsqrt %142 : vector<8x1xf32>
    %144 = vector.broadcast %143 : vector<8x1xf32> to vector<8x32xf32>
    %145 = arith.mulf %140, %144 : vector<8x32xf32>
    %146 = vector.broadcast %8 : vector<1x32xf32> to vector<8x32xf32>
    %147 = arith.mulf %146, %145 : vector<8x32xf32>
    %148 = vector.broadcast %9 : vector<1x32xf32> to vector<8x32xf32>
    %149 = arith.addf %147, %148 : vector<8x32xf32>
    %c0_49 = arith.constant 0 : index
    %c0_50 = arith.constant 0 : index
    %c0_51 = arith.constant 0 : index
    %150 = vector.load %arg7[%c0_49, %c0_50, %c0_51] : memref<1x32x128xf32, #tpu.memory_space<vmem>>, vector<1x32x128xf32>
    %151 = vector.shape_cast %150 : vector<1x32x128xf32> to vector<32x128xf32>
    %cst_52 = arith.constant dense<0.000000e+00> : vector<8x128xf32>
    %152 = tpu.matmul %149, %151, %cst_52 {dimension_numbers = #tpu.dot_dimension_numbers<[1], [0], [0], [1], [0, 0, 1, 1], [], []>} : vector<8x32xf32>, vector<32x128xf32>, vector<8x128xf32> -> vector<8x128xf32>
    %153 = vector.broadcast %13 : vector<1x128xf32> to vector<8x128xf32>
    %154 = arith.addf %152, %153 : vector<8x128xf32>
    %cst_53 = arith.constant 5.000000e-01 : f32
    %155 = vector.broadcast %cst_53 : f32 to vector<8x128xf32>
    %156 = arith.mulf %155, %154 : vector<8x128xf32>
    %cst_54 = arith.constant 0.636619746 : f32
    %157 = math.sqrt %cst_54 : f32
    %158 = arith.mulf %154, %154 : vector<8x128xf32>
    %159 = arith.mulf %154, %158 : vector<8x128xf32>
    %cst_55 = arith.constant 4.471500e-02 : f32
    %160 = vector.broadcast %cst_55 : f32 to vector<8x128xf32>
    %161 = arith.mulf %160, %159 : vector<8x128xf32>
    %162 = arith.addf %154, %161 : vector<8x128xf32>
    %163 = vector.broadcast %157 : f32 to vector<8x128xf32>
    %164 = arith.mulf %163, %162 : vector<8x128xf32>
    %165 = math.tanh %164 : vector<8x128xf32>
    %cst_56 = arith.constant 1.000000e+00 : f32
    %166 = vector.broadcast %cst_56 : f32 to vector<8x128xf32>
    %167 = arith.addf %166, %165 : vector<8x128xf32>
    %168 = arith.mulf %156, %167 : vector<8x128xf32>
    %c0_57 = arith.constant 0 : index
    %c0_58 = arith.constant 0 : index
    %c0_59 = arith.constant 0 : index
    %169 = vector.load %arg8[%c0_57, %c0_58, %c0_59] : memref<1x128x32xf32, #tpu.memory_space<vmem>>, vector<1x128x32xf32>
    %170 = vector.shape_cast %169 : vector<1x128x32xf32> to vector<128x32xf32>
    %cst_60 = arith.constant dense<0.000000e+00> : vector<8x32xf32>
    %171 = tpu.matmul %168, %170, %cst_60 {dimension_numbers = #tpu.dot_dimension_numbers<[1], [0], [0], [1], [0, 0, 1, 1], [], []>} : vector<8x128xf32>, vector<128x32xf32>, vector<8x32xf32> -> vector<8x32xf32>
    %172 = vector.broadcast %11 : vector<1x32xf32> to vector<8x32xf32>
    %173 = arith.addf %171, %172 : vector<8x32xf32>
    %174 = arith.addf %127, %173 : vector<8x32xf32>
    %c0_61 = arith.constant 0 : index
    %c0_62 = arith.constant 0 : index
    %175 = vector.load %arg14[%c0_61, %c0_62] : memref<8x32xf32, #tpu.memory_space<vmem>>, vector<8x32xf32>
    tpu.vector_store %arg14[%c0_61, %c0_62], %174 {strides = array<i32>} : memref<8x32xf32, #tpu.memory_space<vmem>>, vector<8x32xf32>,
    %c1_i32 = arith.constant 1 : i32
    %176 = arith.cmpi eq, %arg1, %c1_i32 : i32
    %177 = arith.extui %176 : i1 to i32
    %c0_i32_63 = arith.constant 0 : i32
    %178 = arith.cmpi ne, %177, %c0_i32_63 : i32
    scf.if %178 {
      %c0_64 = arith.constant 0 : index
      %c0_65 = arith.constant 0 : index
      %179 = vector.load %arg11[%c0_64, %c0_65] : memref<2x32xf32, #tpu.memory_space<vmem>>, vector<2x32xf32>
      %c0_66 = arith.constant 0 : index
      %c0_67 = arith.constant 0 : index
      %180 = vector.load %arg14[%c0_66, %c0_67] : memref<8x32xf32, #tpu.memory_space<vmem>>, vector<8x32xf32>
      %181 = vector.extract_strided_slice %179 {offsets = [0, 0], sizes = [1, 32], strides = [1, 1]} : vector<2x32xf32> to vector<1x32xf32>
      %182 = vector.extract_strided_slice %179 {offsets = [1, 0], sizes = [1, 32], strides = [1, 1]} : vector<2x32xf32> to vector<1x32xf32>
      %cst_68 = arith.constant dense<0.000000e+00> : vector<8xf32>
      %183 = vector.multi_reduction <add>, %180, %cst_68 [1] : vector<8x32xf32> to vector<8xf32>
      %184 = vector.shape_cast %183 : vector<8xf32> to vector<8x1xf32>
      %cst_69 = arith.constant 3.200000e+01 : f32
      %185 = vector.broadcast %cst_69 : f32 to vector<8x1xf32>
      %186 = arith.divf %184, %185 : vector<8x1xf32>
      %187 = vector.broadcast %186 : vector<8x1xf32> to vector<8x32xf32>
      %188 = arith.subf %180, %187 : vector<8x32xf32>
      %189 = arith.mulf %188, %188 : vector<8x32xf32>
      %cst_70 = arith.constant dense<0.000000e+00> : vector<8xf32>
      %190 = vector.multi_reduction <add>, %189, %cst_70 [1] : vector<8x32xf32> to vector<8xf32>
      %191 = vector.shape_cast %190 : vector<8xf32> to vector<8x1xf32>
      %cst_71 = arith.constant 3.200000e+01 : f32
      %192 = vector.broadcast %cst_71 : f32 to vector<8x1xf32>
      %193 = arith.divf %191, %192 : vector<8x1xf32>
      %194 = vector.broadcast %186 : vector<8x1xf32> to vector<8x32xf32>
      %195 = arith.subf %180, %194 : vector<8x32xf32>
      %cst_72 = arith.constant 9.99999974E-6 : f32
      %196 = vector.broadcast %cst_72 : f32 to vector<8x1xf32>
      %197 = arith.addf %193, %196 : vector<8x1xf32>
      %198 = math.rsqrt %197 : vector<8x1xf32>
      %199 = vector.broadcast %198 : vector<8x1xf32> to vector<8x32xf32>
      %200 = arith.mulf %195, %199 : vector<8x32xf32>
      %201 = vector.broadcast %181 : vector<1x32xf32> to vector<8x32xf32>
      %202 = arith.mulf %201, %200 : vector<8x32xf32>
      %203 = vector.broadcast %182 : vector<1x32xf32> to vector<8x32xf32>
      %204 = arith.addf %202, %203 : vector<8x32xf32>
      %c0_73 = arith.constant 0 : index
      %c0_74 = arith.constant 0 : index
      %205 = vector.load %arg12[%c0_73, %c0_74] : memref<32x256xf32, #tpu.memory_space<vmem>>, vector<32x256xf32>
      %cst_75 = arith.constant dense<0.000000e+00> : vector<8x256xf32>
      %206 = tpu.matmul %204, %205, %cst_75 {dimension_numbers = #tpu.dot_dimension_numbers<[1], [0], [0], [1], [0, 0, 1, 1], [], []>} : vector<8x32xf32>, vector<32x256xf32>, vector<8x256xf32> -> vector<8x256xf32>
      %c0_76 = arith.constant 0 : index
      %c0_77 = arith.constant 0 : index
      %207 = vector.load %arg13[%c0_76, %c0_77] : memref<8x256xf32, #tpu.memory_space<vmem>>, vector<8x256xf32>
      tpu.vector_store %arg13[%c0_76, %c0_77], %206 {strides = array<i32>} : memref<8x256xf32, #tpu.memory_space<vmem>>, vector<8x256xf32>,
    } else {
    }
    return
  }
  func.func @transform_0(%arg0: i32, %arg1: i32, %arg2: memref<2x8xi32, #tpu.memory_space<smem>>) -> (i32, i32) {
    %c0_i32 = arith.constant 0 : i32
    %c0_i32_0 = arith.constant 0 : i32
    %c0_i32_1 = arith.constant 0 : i32
    return %c0_i32, %c0_i32_0 : i32, i32
  }
  func.func @transform_1(%arg0: i32, %arg1: i32, %arg2: memref<2x8xi32, #tpu.memory_space<smem>>) -> (i32, i32) {
    %c0_i32 = arith.constant 0 : i32
    %c0_i32_0 = arith.constant 0 : i32
    %c0_i32_1 = arith.constant 0 : i32
    return %c0_i32, %c0_i32_0 : i32, i32
  }
  func.func @transform_2(%arg0: i32, %arg1: i32, %arg2: memref<2x8xi32, #tpu.memory_space<smem>>) -> (i32, i32, i32) {
    %c0_i32 = arith.constant 0 : i32
    %c0_i32_0 = arith.constant 0 : i32
    %c0_i32_1 = arith.constant 0 : i32
    return %arg1, %c0_i32, %c0_i32_0 : i32, i32, i32
  }
  func.func @transform_3(%arg0: i32, %arg1: i32, %arg2: memref<2x8xi32, #tpu.memory_space<smem>>) -> (i32, i32, i32) {
    %c0_i32 = arith.constant 0 : i32
    %c0_i32_0 = arith.constant 0 : i32
    %c0_i32_1 = arith.constant 0 : i32
    return %arg1, %c0_i32, %c0_i32_0 : i32, i32, i32
  }
  func.func @transform_4(%arg0: i32, %arg1: i32, %arg2: memref<2x8xi32, #tpu.memory_space<smem>>) -> (i32, i32, i32) {
    %c0_i32 = arith.constant 0 : i32
    %c0_i32_0 = arith.constant 0 : i32
    %c0_i32_1 = arith.constant 0 : i32
    return %arg1, %c0_i32, %c0_i32_0 : i32, i32, i32
  }
  func.func @transform_5(%arg0: i32, %arg1: i32, %arg2: memref<2x8xi32, #tpu.memory_space<smem>>) -> (i32, i32, i32) {
    %c0_i32 = arith.constant 0 : i32
    %c0_i32_0 = arith.constant 0 : i32
    %c0_i32_1 = arith.constant 0 : i32
    return %arg1, %c0_i32, %c0_i32_0 : i32, i32, i32
  }
  func.func @transform_6(%arg0: i32, %arg1: i32, %arg2: memref<2x8xi32, #tpu.memory_space<smem>>) -> (i32, i32, i32) {
    %c0_i32 = arith.constant 0 : i32
    %c0_i32_0 = arith.constant 0 : i32
    %c0_i32_1 = arith.constant 0 : i32
    return %arg1, %c0_i32, %c0_i32_0 : i32, i32, i32
  }
  func.func @transform_7(%arg0: i32, %arg1: i32, %arg2: memref<2x8xi32, #tpu.memory_space<smem>>) -> (i32, i32, i32) {
    %c0_i32 = arith.constant 0 : i32
    %c0_i32_0 = arith.constant 0 : i32
    %c0_i32_1 = arith.constant 0 : i32
    return %arg1, %c0_i32, %c0_i32_0 : i32, i32, i32
  }
  func.func @transform_8(%arg0: i32, %arg1: i32, %arg2: memref<2x8xi32, #tpu.memory_space<smem>>) -> (i32, i32) {
    %c0_i32 = arith.constant 0 : i32
    %c0_i32_0 = arith.constant 0 : i32
    %c0_i32_1 = arith.constant 0 : i32
    return %c0_i32, %c0_i32_0 : i32, i32
  }
  func.func @transform_9(%arg0: i32, %arg1: i32, %arg2: memref<2x8xi32, #tpu.memory_space<smem>>) -> (i32, i32) {
    %c0_i32 = arith.constant 0 : i32
    %c0_i32_0 = arith.constant 0 : i32
    %c0_i32_1 = arith.constant 0 : i32
    return %c0_i32, %c0_i32_0 : i32, i32
  }
  func.func @transform_10(%arg0: i32, %arg1: i32, %arg2: memref<2x8xi32, #tpu.memory_space<smem>>) -> (i32, i32) {
    %c0_i32 = arith.constant 0 : i32
    %c0_i32_0 = arith.constant 0 : i32
    return %arg0, %c0_i32 : i32, i32
  }
}

</mosaic_0001>

<llo_original>
// kernel: tpu_custom_call.1
$region0: #{tpu_custom_call.1}
  #allocation0 [shape = 'u32[]', space=smem, size = 0x4, offset = 0x4, fixed_abs, tag = 'smem constant byte address 0x4 - core index']
  #allocation1 [shape = 'u32[144,128]{1,0:T(1,128)}', space=vmem, size = 0x12000, scoped, tag = 'internal scratch']
  #allocation2 [shape = 'f32[8,32]{1,0:T(8,128)}', space=vmem, size = 0x1000, scoped, tag = 'scratch operand']
  #allocation3 [shape = 's32[1]{0}', space=sflag, size = 0x4, scoped, tag = 'scoped memory for tpu_custom_call.1']
  #allocation4 [shape = 'u8[1024]{0}', space=smem, size = 0x400, scoped, tag = 'prefetched SMEM operand 0']
  %s0 = inlined_call_operand.vmem [shape: s32[2,8], index: 0, kind: input, shape index: {}]
  %s1 = inlined_call_operand.vmem [shape: f32[256,32], index: 1, kind: input, shape index: {}]
  %s2 = inlined_call_operand.vmem [shape: f32[16,32], index: 2, kind: input, shape index: {}]
  %s3 = inlined_call_operand.vmem [shape: f32[2,32,96], index: 3, kind: input, shape index: {}]
  %s4 = inlined_call_operand.vmem [shape: f32[2,32,32], index: 4, kind: input, shape index: {}]
  %s5 = inlined_call_operand.vmem [shape: f32[2,32,128], index: 5, kind: input, shape index: {}]
  %s6 = inlined_call_operand.vmem [shape: f32[2,128,32], index: 6, kind: input, shape index: {}]
  %s7 = inlined_call_operand.vmem [shape: f32[2,6,32], index: 7, kind: input, shape index: {}]
  %s8 = inlined_call_operand.vmem [shape: f32[2,1,128], index: 8, kind: input, shape index: {}]
  %s9 = inlined_call_operand.vmem [shape: f32[2,32], index: 9, kind: input, shape index: {}]
  %s10 = inlined_call_operand.vmem [shape: f32[32,256], index: 10, kind: input, shape index: {}]
  %s11 = inlined_call_operand.hbm [shape: f32[16,256], index: 11, kind: output, shape index: {}]
  %s12 = sld [smem:[#allocation0]]
  $region81: #{tpu_custom_call.1} parent=0
    _
  %s14 = ssub.s32 1, %s12
  %s15 = scalar_select 0, %s14, %s12
  %s16 = sshll.u32 %s0, 4
  %s17 = int_to_ptr.vmem [resolvable:$true] %s16
  %19 = dma.vmem_to_smem %s17, 32, [#allocation4], [#allocation3]
  %20 = dma.done [#allocation3], 32
  %21 = sfence
  $region1: #{tpu_custom_call.1} parent=0
    #allocation5 [shape = 'u8[16384]{0}', space=vmem, size = 0x4000, scoped, tag = 'output window, operand 0']
    #allocation6 [shape = 's32[2]{0}', space=sflag, size = 0x8, scoped, tag = 'scoped memory for tpu_custom_call.1']
    %22 = vsyncpa [#allocation6], 0
    %s23 = scalar_lea.sflag [#allocation6], 1
    %24 = vsyncpa %s23, 0
    loop: start=0, step=1, limit=6
    $region2: #{tpu_custom_call.1} parent=1 // loop_pre_header
      _
    $region3: #{tpu_custom_call.1} parent=1 // loop_header
      %s26 = sphi 0, %s30
      %p27 = scmp.ge.s32.totalorder %s26, 6
      %s33 = sphi 0, %s45
      %s34 = sphi 0, %s41
      %s35 = sphi 0, %s33
      %s36 = sphi 0, %s34
      %s37 = sphi 0, %s35
      %s38 = sphi 0, %s36
      %s46 = sphi 0, %s46
      %s48 = sphi 0, %s46
      %s49 = sphi 0, %s48
      %s63 = sphi 0, %s49
      %s67 = sphi 0, %s67
      %s69 = sphi 0, %s67
      %s70 = sphi 0, %s69
      %s84 = sphi 0, %s70
      %s90 = sphi 0, %s92
      %s93 = sphi 0, %s90
      %s94 = sphi 0, %s93
      %s110 = sphi 0, %s94
      %s116 = sphi 0, %s118
      %s119 = sphi 0, %s116
      %s120 = sphi 0, %s119
      %s136 = sphi 0, %s120
      %s142 = sphi 0, %s144
      %s145 = sphi 0, %s142
      %s146 = sphi 0, %s145
      %s162 = sphi 0, %s146
      %s168 = sphi 0, %s170
      %s171 = sphi 0, %s168
      %s172 = sphi 0, %s171
      %s188 = sphi 0, %s172
      %s194 = sphi 0, %s196
      %s197 = sphi 0, %s194
      %s198 = sphi 0, %s197
      %s214 = sphi 0, %s198
      %s220 = sphi 0, %s222
      %s223 = sphi 0, %s220
      %s224 = sphi 0, %s223
      %s240 = sphi 0, %s224
      %s244 = sphi 0, %s244
      %s246 = sphi 0, %s244
      %s247 = sphi 0, %s246
      %s261 = sphi 0, %s247
      %s265 = sphi 0, %s265
      %s267 = sphi 0, %s265
      %s268 = sphi 0, %s267
      %s282 = sphi 0, %s268
      %s288 = sphi 0, %s290
      %s291 = sphi 0, %s288
      %s292 = sphi 0, %s291
      %s308 = sphi 0, %s292
    $region4: #{tpu_custom_call.1} parent=1 // loop_header_branch
      %29 = sbr.rel (%p27) target = $region8
    $region5: #{tpu_custom_call.1} parent=1 // loop_body
      %s31 = ssub.s32 %s26, 1
      %s32 = ssub.s32 %s26, 2
      %s39 = sadd.s32 1, %s34
      %p40 = scmp.ge.s32.totalorder %s39, 2
      %s41 = scalar_select %p40, 0, %s39
      %s42 = sadd.s32 1, %s33
      %s43 = scalar_select %p40, %s42, %s33
      %p44 = scmp.ge.s32.totalorder %s43, 2
      %s45 = scalar_select %p44, 0, %s43
      %s47 = sadd.s32 %s46, 1
      %p50 = scmp.eq.s32.totalorder %s26, 3
      %p51 = scmp.ne.s32.totalorder %s46, %s48
      %p52 = scmp.eq.s32.totalorder %s26, 0
      %p53 = por %p51, %p52
      %p54 = scmp.ne.s32.totalorder %s46, %s48
      %p55 = scmp.eq.s32.totalorder %s31, 3
      %p56 = por %p54, %p55
      %p57 = scmp.ne.s32.totalorder %s48, %s49
      %p58 = scmp.eq.s32.totalorder %s31, 0
      %p59 = por %p57, %p58
      %p60 = scmp.ne.s32.totalorder %s48, %s49
      %p61 = scmp.eq.s32.totalorder %s32, 3
      %p62 = por %p60, %p61
      %p64 = scmp.ne.s32.totalorder %s49, %s63
      %p65 = scmp.eq.s32.totalorder %s32, 0
      %p66 = por %p64, %p65
      %s68 = sadd.s32 %s67, 1
      %p71 = scmp.eq.s32.totalorder %s26, 3
      %p72 = scmp.ne.s32.totalorder %s67, %s69
      %p73 = scmp.eq.s32.totalorder %s26, 0
      %p74 = por %p72, %p73
      %p75 = scmp.ne.s32.totalorder %s67, %s69
      %p76 = scmp.eq.s32.totalorder %s31, 3
      %p77 = por %p75, %p76
      %p78 = scmp.ne.s32.totalorder %s69, %s70
      %p79 = scmp.eq.s32.totalorder %s31, 0
      %p80 = por %p78, %p79
      %p81 = scmp.ne.s32.totalorder %s69, %s70
      %p82 = scmp.eq.s32.totalorder %s32, 3
      %p83 = por %p81, %p82
      %p85 = scmp.ne.s32.totalorder %s70, %s84
      %p86 = scmp.eq.s32.totalorder %s32, 0
      %p87 = por %p85, %p86
      %s88 = ssub.s32 %s34, %s41
      %p89 = scmp.eq.s32.totalorder %s88, 0
      %s91 = sadd.s32 %s90, 1
      %s92 = scalar_select %p89, %s90, %s91
      %p95 = pneg %p89
      %p96 = scmp.eq.s32.totalorder %s26, 3
      %p97 = por %p95, %p96
      %p98 = scmp.ne.s32.totalorder %s90, %s93
      %p99 = scmp.eq.s32.totalorder %s26, 0
      %p100 = por %p98, %p99
      %p101 = scmp.ne.s32.totalorder %s90, %s93
      %p102 = scmp.eq.s32.totalorder %s31, 3
      %p103 = por %p101, %p102
      %p104 = scmp.ne.s32.totalorder %s93, %s94
      %p105 = scmp.eq.s32.totalorder %s31, 0
      %p106 = por %p104, %p105
      %p107 = scmp.ne.s32.totalorder %s93, %s94
      %p108 = scmp.eq.s32.totalorder %s32, 3
      %p109 = por %p107, %p108
      %p111 = scmp.ne.s32.totalorder %s94, %s110
      %p112 = scmp.eq.s32.totalorder %s32, 0
      %p113 = por %p111, %p112
      %s114 = ssub.s32 %s34, %s41
      %p115 = scmp.eq.s32.totalorder %s114, 0
      %s117 = sadd.s32 %s116, 1
      %s118 = scalar_select %p115, %s116, %s117
      %p121 = pneg %p115
      %p122 = scmp.eq.s32.totalorder %s26, 3
      %p123 = por %p121, %p122
      %p124 = scmp.ne.s32.totalorder %s116, %s119
      %p125 = scmp.eq.s32.totalorder %s26, 0
      %p126 = por %p124, %p125
      %p127 = scmp.ne.s32.totalorder %s116, %s119
      %p128 = scmp.eq.s32.totalorder %s31, 3
      %p129 = por %p127, %p128
      %p130 = scmp.ne.s32.totalorder %s119, %s120
      %p131 = scmp.eq.s32.totalorder %s31, 0
      %p132 = por %p130, %p131
      %p133 = scmp.ne.s32.totalorder %s119, %s120
      %p134 = scmp.eq.s32.totalorder %s32, 3
      %p135 = por %p133, %p134
      %p137 = scmp.ne.s32.totalorder %s120, %s136
      %p138 = scmp.eq.s32.totalorder %s32, 0
      %p139 = por %p137, %p138
      %s140 = ssub.s32 %s34, %s41
      %p141 = scmp.eq.s32.totalorder %s140, 0
      %s143 = sadd.s32 %s142, 1
      %s144 = scalar_select %p141, %s142, %s143
      %p147 = pneg %p141
      %p148 = scmp.eq.s32.totalorder %s26, 3
      %p149 = por %p147, %p148
      %p150 = scmp.ne.s32.totalorder %s142, %s145
      %p151 = scmp.eq.s32.totalorder %s26, 0
      %p152 = por %p150, %p151
      %p153 = scmp.ne.s32.totalorder %s142, %s145
      %p154 = scmp.eq.s32.totalorder %s31, 3
      %p155 = por %p153, %p154
      %p156 = scmp.ne.s32.totalorder %s145, %s146
      %p157 = scmp.eq.s32.totalorder %s31, 0
      %p158 = por %p156, %p157
      %p159 = scmp.ne.s32.totalorder %s145, %s146
      %p160 = scmp.eq.s32.totalorder %s32, 3
      %p161 = por %p159, %p160
      %p163 = scmp.ne.s32.totalorder %s146, %s162
      %p164 = scmp.eq.s32.totalorder %s32, 0
      %p165 = por %p163, %p164
      %s166 = ssub.s32 %s34, %s41
      %p167 = scmp.eq.s32.totalorder %s166, 0
      %s169 = sadd.s32 %s168, 1
      %s170 = scalar_select %p167, %s168, %s169
      %p173 = pneg %p167
      %p174 = scmp.eq.s32.totalorder %s26, 3
      %p175 = por %p173, %p174
      %p176 = scmp.ne.s32.totalorder %s168, %s171
      %p177 = scmp.eq.s32.totalorder %s26, 0
      %p178 = por %p176, %p177
      %p179 = scmp.ne.s32.totalorder %s168, %s171
      %p180 = scmp.eq.s32.totalorder %s31, 3
      %p181 = por %p179, %p180
      %p182 = scmp.ne.s32.totalorder %s171, %s172
      %p183 = scmp.eq.s32.totalorder %s31, 0
      %p184 = por %p182, %p183
      %p185 = scmp.ne.s32.totalorder %s171, %s172
      %p186 = scmp.eq.s32.totalorder %s32, 3
      %p187 = por %p185, %p186
      %p189 = scmp.ne.s32.totalorder %s172, %s188
      %p190 = scmp.eq.s32.totalorder %s32, 0
      %p191 = por %p189, %p190
      %s192 = ssub.s32 %s34, %s41
      %p193 = scmp.eq.s32.totalorder %s192, 0
      %s195 = sadd.s32 %s194, 1
      %s196 = scalar_select %p193, %s194, %s195
      %p199 = pneg %p193
      %p200 = scmp.eq.s32.totalorder %s26, 3
      %p201 = por %p199, %p200
      %p202 = scmp.ne.s32.totalorder %s194, %s197
      %p203 = scmp.eq.s32.totalorder %s26, 0
      %p204 = por %p202, %p203
      %p205 = scmp.ne.s32.totalorder %s194, %s197
      %p206 = scmp.eq.s32.totalorder %s31, 3
      %p207 = por %p205, %p206
      %p208 = scmp.ne.s32.totalorder %s197, %s198
      %p209 = scmp.eq.s32.totalorder %s31, 0
      %p210 = por %p208, %p209
      %p211 = scmp.ne.s32.totalorder %s197, %s198
      %p212 = scmp.eq.s32.totalorder %s32, 3
      %p213 = por %p211, %p212
      %p215 = scmp.ne.s32.totalorder %s198, %s214
      %p216 = scmp.eq.s32.totalorder %s32, 0
      %p217 = por %p215, %p216
      %s218 = ssub.s32 %s34, %s41
      %p219 = scmp.eq.s32.totalorder %s218, 0
      %s221 = sadd.s32 %s220, 1
      %s222 = scalar_select %p219, %s220, %s221
      %p225 = pneg %p219
      %p226 = scmp.eq.s32.totalorder %s26, 3
      %p227 = por %p225, %p226
      %p228 = scmp.ne.s32.totalorder %s220, %s223
      %p229 = scmp.eq.s32.totalorder %s26, 0
      %p230 = por %p228, %p229
      %p231 = scmp.ne.s32.totalorder %s220, %s223
      %p232 = scmp.eq.s32.totalorder %s31, 3
      %p233 = por %p231, %p232
      %p234 = scmp.ne.s32.totalorder %s223, %s224
      %p235 = scmp.eq.s32.totalorder %s31, 0
      %p236 = por %p234, %p235
      %p237 = scmp.ne.s32.totalorder %s223, %s224
      %p238 = scmp.eq.s32.totalorder %s32, 3
      %p239 = por %p237, %p238
      %p241 = scmp.ne.s32.totalorder %s224, %s240
      %p242 = scmp.eq.s32.totalorder %s32, 0
      %p243 = por %p241, %p242
      %s245 = sadd.s32 %s244, 1
      %p248 = scmp.eq.s32.totalorder %s26, 3
      %p249 = scmp.ne.s32.totalorder %s244, %s246
      %p250 = scmp.eq.s32.totalorder %s26, 0
      %p251 = por %p249, %p250
      %p252 = scmp.ne.s32.totalorder %s244, %s246
      %p253 = scmp.eq.s32.totalorder %s31, 3
      %p254 = por %p252, %p253
      %p255 = scmp.ne.s32.totalorder %s246, %s247
      %p256 = scmp.eq.s32.totalorder %s31, 0
      %p257 = por %p255, %p256
      %p258 = scmp.ne.s32.totalorder %s246, %s247
      %p259 = scmp.eq.s32.totalorder %s32, 3
      %p260 = por %p258, %p259
      %p262 = scmp.ne.s32.totalorder %s247, %s261
      %p263 = scmp.eq.s32.totalorder %s32, 0
      %p264 = por %p262, %p263
      %s266 = sadd.s32 %s265, 1
      %p269 = scmp.eq.s32.totalorder %s26, 3
      %p270 = scmp.ne.s32.totalorder %s265, %s267
      %p271 = scmp.eq.s32.totalorder %s26, 0
      %p272 = por %p270, %p271
      %p273 = scmp.ne.s32.totalorder %s265, %s267
      %p274 = scmp.eq.s32.totalorder %s31, 3
      %p275 = por %p273, %p274
      %p276 = scmp.ne.s32.totalorder %s267, %s268
      %p277 = scmp.eq.s32.totalorder %s31, 0
      %p278 = por %p276, %p277
      %p279 = scmp.ne.s32.totalorder %s267, %s268
      %p280 = scmp.eq.s32.totalorder %s32, 3
      %p281 = por %p279, %p280
      %p283 = scmp.ne.s32.totalorder %s268, %s282
      %p284 = scmp.eq.s32.totalorder %s32, 0
      %p285 = por %p283, %p284
      %s286 = ssub.s32 %s33, %s45
      %p287 = scmp.eq.s32.totalorder %s286, 0
      %s289 = sadd.s32 %s288, 1
      %s290 = scalar_select %p287, %s288, %s289
      %p293 = pneg %p287
      %p294 = scmp.eq.s32.totalorder %s26, 3
      %p295 = por %p293, %p294
      %p296 = scmp.ne.s32.totalorder %s288, %s291
      %p297 = scmp.eq.s32.totalorder %s26, 0
      %p298 = por %p296, %p297
      %p299 = scmp.ne.s32.totalorder %s288, %s291
      %p300 = scmp.eq.s32.totalorder %s31, 3
      %p301 = por %p299, %p300
      %p302 = scmp.ne.s32.totalorder %s291, %s292
      %p303 = scmp.eq.s32.totalorder %s31, 0
      %p304 = por %p302, %p303
      %p305 = scmp.ne.s32.totalorder %s291, %s292
      %p306 = scmp.eq.s32.totalorder %s32, 3
      %p307 = por %p305, %p306
      %p309 = scmp.ne.s32.totalorder %s292, %s308
      %p310 = scmp.eq.s32.totalorder %s32, 0
      %p311 = por %p309, %p310
      %p312 = scmp.le.s32.totalorder 1, %s26
      %p313 = scmp.lt.s32.totalorder %s26, 5
      %p314 = pnand %p312, %p313
      %p315 = pneg %p314
      // Predicated region
      $region9: #{tpu_custom_call.1} parent=5 // pred_check
        _
      $region10: #{tpu_custom_call.1} parent=5 // pred_check_branch
        %317 = sbr.rel (%p314) target = $region12
      $region11: #{tpu_custom_call.1} parent=5 // pred_region
        %s318 = ssub.s32 %s26, 1
        // Predicated region
        $region13: #{tpu_custom_call.1} parent=11 // pred_check
          %p319 = pneg %p59
        $region14: #{tpu_custom_call.1} parent=11 // pred_check_branch
          %321 = sbr.rel (%p319) target = $region16
        $region15: #{tpu_custom_call.1} parent=11 // pred_region
          _
        $region16: #{tpu_custom_call.1} parent=11 // pred_fallthru
          _
        // Predicated region
        $region17: #{tpu_custom_call.1} parent=11 // pred_check
          %p322 = pneg %p80
        $region18: #{tpu_custom_call.1} parent=11 // pred_check_branch
          %324 = sbr.rel (%p322) target = $region20
        $region19: #{tpu_custom_call.1} parent=11 // pred_region
          _
        $region20: #{tpu_custom_call.1} parent=11 // pred_fallthru
          _
        // Predicated region
        $region21: #{tpu_custom_call.1} parent=11 // pred_check
          %p325 = pneg %p257
        $region22: #{tpu_custom_call.1} parent=11 // pred_check_branch
          %327 = sbr.rel (%p325) target = $region24
        $region23: #{tpu_custom_call.1} parent=11 // pred_region
          _
        $region24: #{tpu_custom_call.1} parent=11 // pred_fallthru
          _
        // Predicated region
        $region25: #{tpu_custom_call.1} parent=11 // pred_check
          %p328 = pneg %p278
        $region26: #{tpu_custom_call.1} parent=11 // pred_check_branch
          %330 = sbr.rel (%p328) target = $region28
        $region27: #{tpu_custom_call.1} parent=11 // pred_region
          _
        $region28: #{tpu_custom_call.1} parent=11 // pred_fallthru
          _
      $region12: #{tpu_custom_call.1} parent=5 // pred_fallthru
        _
      %p331 = scmp.lt.s32.totalorder %s26, 4
      // Predicated region
      $region29: #{tpu_custom_call.1} parent=5 // pred_check
        %p332 = pneg %p331
      $region30: #{tpu_custom_call.1} parent=5 // pred_check_branch
        %334 = sbr.rel (%p332) target = $region32
      $region31: #{tpu_custom_call.1} parent=5 // pred_region
        // Predicated region
        $region33: #{tpu_custom_call.1} parent=31 // pred_check
          %p335 = pneg %p100
        $region34: #{tpu_custom_call.1} parent=31 // pred_check_branch
          %337 = sbr.rel (%p335) target = $region36
        $region35: #{tpu_custom_call.1} parent=31 // pred_region
          %p338 = scmp.lt.s32.totalorder %s34, 1
          %s339 = scalar_select %p338, %s34, 1
          %s340 = smul.addr %s339, 4
          %s341 = smul.addr %s340, 8
          %s342 = scalar_lea.vmem %s3, %s341
        $region36: #{tpu_custom_call.1} parent=31 // pred_fallthru
          _
        // Predicated region
        $region37: #{tpu_custom_call.1} parent=31 // pred_check
          %p343 = pneg %p126
        $region38: #{tpu_custom_call.1} parent=31 // pred_check_branch
          %345 = sbr.rel (%p343) target = $region40
        $region39: #{tpu_custom_call.1} parent=31 // pred_region
          %p346 = scmp.lt.s32.totalorder %s34, 1
          %s347 = scalar_select %p346, %s34, 1
          %s348 = smul.addr %s347, 4
          %s349 = smul.addr %s348, 8
          %s350 = scalar_lea.vmem %s4, %s349
        $region40: #{tpu_custom_call.1} parent=31 // pred_fallthru
          _
        // Predicated region
        $region41: #{tpu_custom_call.1} parent=31 // pred_check
          %p351 = pneg %p152
        $region42: #{tpu_custom_call.1} parent=31 // pred_check_branch
          %353 = sbr.rel (%p351) target = $region44
        $region43: #{tpu_custom_call.1} parent=31 // pred_region
          %p354 = scmp.lt.s32.totalorder %s34, 1
          %s355 = scalar_select %p354, %s34, 1
          %s356 = smul.addr %s355, 4
          %s357 = smul.addr %s356, 8
          %s358 = scalar_lea.vmem %s5, %s357
        $region44: #{tpu_custom_call.1} parent=31 // pred_fallthru
          _
        // Predicated region
        $region45: #{tpu_custom_call.1} parent=31 // pred_check
          %p359 = pneg %p178
        $region46: #{tpu_custom_call.1} parent=31 // pred_check_branch
          %361 = sbr.rel (%p359) target = $region48
        $region47: #{tpu_custom_call.1} parent=31 // pred_region
          %p362 = scmp.lt.s32.totalorder %s34, 1
          %s363 = scalar_select %p362, %s34, 1
          %s364 = smul.addr %s363, 16
          %s365 = smul.addr %s364, 8
          %s366 = scalar_lea.vmem %s6, %s365
        $region48: #{tpu_custom_call.1} parent=31 // pred_fallthru
          _
        // Predicated region
        $region49: #{tpu_custom_call.1} parent=31 // pred_check
          %p367 = pneg %p204
        $region50: #{tpu_custom_call.1} parent=31 // pred_check_branch
          %369 = sbr.rel (%p367) target = $region52
        $region51: #{tpu_custom_call.1} parent=31 // pred_region
          %p370 = scmp.lt.s32.totalorder %s34, 1
          %s371 = scalar_select %p370, %s34, 1
          %s372 = smul.addr %s371, 8
          %s373 = scalar_lea.vmem %s7, %s372
        $region52: #{tpu_custom_call.1} parent=31 // pred_fallthru
          _
        // Predicated region
        $region53: #{tpu_custom_call.1} parent=31 // pred_check
          %p374 = pneg %p230
        $region54: #{tpu_custom_call.1} parent=31 // pred_check_branch
          %376 = sbr.rel (%p374) target = $region56
        $region55: #{tpu_custom_call.1} parent=31 // pred_region
          %p377 = scmp.lt.s32.totalorder %s34, 1
          %s378 = scalar_select %p377, %s34, 1
          %s379 = scalar_lea.vmem %s8, %s378
        $region56: #{tpu_custom_call.1} parent=31 // pred_fallthru
          _
      $region32: #{tpu_custom_call.1} parent=5 // pred_fallthru
        _
      %p380 = scmp.le.s32.totalorder 1, %s26
      %p381 = scmp.lt.s32.totalorder %s26, 5
      %p382 = pnand %p380, %p381
      %p383 = pneg %p382
      // Predicated region
      $region57: #{tpu_custom_call.1} parent=5 // pred_check
        _
      $region58: #{tpu_custom_call.1} parent=5 // pred_check_branch
        %385 = sbr.rel (%p382) target = $region60
      $region59: #{tpu_custom_call.1} parent=5 // pred_region
        %s386 = ssub.s32 %s26, 1
        %p387 = pneg %p59
        %p388 = pneg %p56
        %p389 = pneg %p80
        %p390 = pneg %p77
        %p391 = scmp.lt.s32.totalorder %s36, 1
        %s392 = scalar_select %p391, %s36, 1
        %s393 = smul.addr %s392, 4
        %s394 = smul.addr %s393, 8
        %s395 = scalar_lea.vmem %s3, %s394
        %p396 = pneg %p106
        %p397 = pneg %p103
        %p398 = scmp.lt.s32.totalorder %s36, 1
        %s399 = scalar_select %p398, %s36, 1
        %s400 = smul.addr %s399, 4
        %s401 = smul.addr %s400, 8
        %s402 = scalar_lea.vmem %s4, %s401
        %p403 = pneg %p132
        %p404 = pneg %p129
        %p405 = scmp.lt.s32.totalorder %s36, 1
        %s406 = scalar_select %p405, %s36, 1
        %s407 = smul.addr %s406, 4
        %s408 = smul.addr %s407, 8
        %s409 = scalar_lea.vmem %s5, %s408
        %p410 = pneg %p158
        %p411 = pneg %p155
        %p412 = scmp.lt.s32.totalorder %s36, 1
        %s413 = scalar_select %p412, %s36, 1
        %s414 = smul.addr %s413, 16
        %s415 = smul.addr %s414, 8
        %s416 = scalar_lea.vmem %s6, %s415
        %p417 = pneg %p184
        %p418 = pneg %p181
        %p419 = scmp.lt.s32.totalorder %s36, 1
        %s420 = scalar_select %p419, %s36, 1
        %s421 = smul.addr %s420, 8
        %s422 = scalar_lea.vmem %s7, %s421
        %p423 = pneg %p210
        %p424 = pneg %p207
        %p425 = scmp.lt.s32.totalorder %s36, 1
        %s426 = scalar_select %p425, %s36, 1
        %s427 = scalar_lea.vmem %s8, %s426
        %p428 = pneg %p236
        %p429 = pneg %p233
        %p430 = pneg %p257
        %p431 = pneg %p254
        %p432 = pneg %p278
        %p433 = pneg %p275
        %p434 = pneg %p304
        %p435 = pneg %p301
        %s436 = sand.u32 %s291, 1
        %s437 = scalar_lea.sflag [#allocation6], %s436
        %s438 = sand.u32 %s291, 1
        %s439 = smul.addr %s438, 16
        %s440 = scalar_lea.vmem [#allocation5], %s439
        %p441 = scmp.lt.s32.totalorder %s36, 1
        %s442 = scalar_select %p441, %s36, 1
        %s443 = smul.addr %s442, 4
        %s444 = smul.addr %s443, 8
        %s445 = scalar_lea.vmem %s3, %s444
        %p446 = scmp.lt.s32.totalorder %s36, 1
        %s447 = scalar_select %p446, %s36, 1
        %s448 = smul.addr %s447, 4
        %s449 = smul.addr %s448, 8
        %s450 = scalar_lea.vmem %s4, %s449
        %p451 = scmp.lt.s32.totalorder %s36, 1
        %s452 = scalar_select %p451, %s36, 1
        %s453 = smul.addr %s452, 4
        %s454 = smul.addr %s453, 8
        %s455 = scalar_lea.vmem %s5, %s454
        %p456 = scmp.lt.s32.totalorder %s36, 1
        %s457 = scalar_select %p456, %s36, 1
        %s458 = smul.addr %s457, 16
        %s459 = smul.addr %s458, 8
        %s460 = scalar_lea.vmem %s6, %s459
        %p461 = scmp.lt.s32.totalorder %s36, 1
        %s462 = scalar_select %p461, %s36, 1
        %s463 = smul.addr %s462, 8
        %s464 = scalar_lea.vmem %s7, %s463
        %p465 = scmp.lt.s32.totalorder %s36, 1
        %s466 = scalar_select %p465, %s36, 1
        %s467 = scalar_lea.vmem %s8, %s466
        %p468 = scmp.eq.s32.totalorder %s36, 0
        // Predicated region
        $region61: #{tpu_custom_call.1} parent=59 // pred_check
          %p469 = pneg %p468
        $region62: #{tpu_custom_call.1} parent=59 // pred_check_branch
          %471 = sbr.rel (%p469) target = $region64
        $region63: #{tpu_custom_call.1} parent=59 // pred_region
          %s472 = smul.u32 %s35, 128
          %s473 = sld [smem:[#allocation4 + %s472]]
          %s474 = scalar_lea.vmem %s1, %s473
          %v475 = vld [vmem:[%s474] sm:$0x1]
          %s476 = sadd.s32 %s472, 1
          %s477 = sld [smem:[#allocation4 + %s476]]
          %s478 = scalar_lea.vmem %s1, %s477
          %v479 = vld [vmem:[%s478] sm:$0x1]
          %s480 = sadd.s32 %s472, 2
          %s481 = sld [smem:[#allocation4 + %s480]]
          %s482 = scalar_lea.vmem %s1, %s481
          %v483 = vld [vmem:[%s482] sm:$0x1]
          %s484 = sadd.s32 %s472, 3
          %s485 = sld [smem:[#allocation4 + %s484]]
          %s486 = scalar_lea.vmem %s1, %s485
          %v487 = vld [vmem:[%s486] sm:$0x1]
          %s488 = sadd.s32 %s472, 4
          %s489 = sld [smem:[#allocation4 + %s488]]
          %s490 = scalar_lea.vmem %s1, %s489
          %v491 = vld [vmem:[%s490] sm:$0x1]
          %s492 = sadd.s32 %s472, 5
          %s493 = sld [smem:[#allocation4 + %s492]]
          %s494 = scalar_lea.vmem %s1, %s493
          %v495 = vld [vmem:[%s494] sm:$0x1]
          %s496 = sadd.s32 %s472, 6
          %s497 = sld [smem:[#allocation4 + %s496]]
          %s498 = scalar_lea.vmem %s1, %s497
          %v499 = vld [vmem:[%s498] sm:$0x1]
          %s500 = sadd.s32 %s472, 7
          %s501 = sld [smem:[#allocation4 + %s500]]
          %s502 = scalar_lea.vmem %s1, %s501
          %v503 = vld [vmem:[%s502] sm:$0x1]
          %v505 = vrot.slane %v479, 7
          %v508 = vrot.slane %v483, 6
          %v511 = vrot.slane %v487, 5
          %v514 = vrot.slane %v491, 4
          %v517 = vrot.slane %v495, 3
          %v520 = vrot.slane %v499, 2
          %v523 = vrot.slane %v503, 1
          %vm525 = vcmask 1040384
          %v526 = vsel %vm525, %v475, %v505
          %vm527 = vcmask 1041408
          %v528 = vsel %vm527, %v526, %v508
          %vm529 = vcmask 1042432
          %v530 = vsel %vm529, %v528, %v511
          %vm531 = vcmask 1043456
          %v532 = vsel %vm531, %v530, %v514
          %vm533 = vcmask 1044480
          %v534 = vsel %vm533, %v532, %v517
          %vm535 = vcmask 1045504
          %v536 = vsel %vm535, %v534, %v520
          %vm537 = vcmask 1046528
          %v538 = vsel %vm537, %v536, %v523
          %v539 = vld [vmem:[%s2] sm:$0xff]
          %v540 = vadd.f32 %v538, %v539
          %vm541 = vcmask 261120
          %542 = vst.msk [vmem:[#allocation2] sm:$0xff] %vm541, %v540
        $region64: #{tpu_custom_call.1} parent=59 // pred_fallthru
          _
        %v543 = vld [vmem:[#allocation2] sm:$0xff]
        %v544 = vld [vmem:[%s464] sm:$0x3f]
        %v545 = vld [vmem:[%s467] sm:$0x1]
        %vm546 = vcmask 261120
        %v547 = vsel %vm546, %v543, 0.0
        %548 = vadd.xlane.f32.xlu0 %v547
        %v549 = vpop.xlane.xlu0 %548
        %v550 = vrcp.pop 32.0
        %v551 = vmul.f32 %v549, %v550
        %v552 = vsub.f32 %v543, %v551
        %v553 = vmul.f32 %v552, %v552
        %v554 = vsel %vm546, %v553, 0.0
        %555 = vadd.xlane.f32.xlu0 %v554
        %v556 = vpop.xlane.xlu0 %555
        %v557 = vmul.f32 %v556, %v550
        %v558 = vadd.f32 %v557, 1e-05
        %v559 = vrsqrt.pop %v558
        %v560 = vmul.f32 %v552, %v559
        %v561 = vlaneseq
        %v562 = vshrl.u32 %v561, 7
        %v563 = vsub.s32 0, %v562
        %v564 = vrot.slane %v544, %v563
        %v565 = vmul.f32 %v564, %v560
        %v566 = vlaneseq
        %v567 = vshrl.u32 %v566, 7
        %v568 = vsub.s32 1, %v567
        %v569 = vrot.slane %v544, %v568
        %v570 = vadd.f32 %v565, %v569
        %v571 = vld [vmem:[%s445] sm:$0xff]
        %v572 = vld [vmem:[%s445 + $0x8] sm:$0xff]
        %v573 = vld [vmem:[%s445 + $0x10] sm:$0xff]
        %v574 = vld [vmem:[%s445 + $0x18] sm:$0xff]
        %v576 = vsel %vm546, %v570, 0
        %578 = vmatprep.subr.mxu0 0.0
        %579 = vmatpush1.msra.mxu0 0.0
        %580 = vmatprep.subr.mxu0 0.0
        %581 = vmatpush1.msra.mxu0 0.0
        %582 = vmatprep.subr.mxu0 0.0
        %583 = vmatpush1.msra.mxu0 0.0
        %584 = vmatprep.subr.mxu0 0.0
        %585 = vmatpush1.msra.mxu0 0.0
        %586 = vmatprep.subr.mxu0 0.0
        %587 = vmatpush1.msra.mxu0 0.0
        %588 = vmatprep.subr.mxu0 0.0
        %589 = vmatpush1.msra.mxu0 0.0
        %590 = vmatprep.subr.mxu0 0.0
        %591 = vmatpush1.msra.mxu0 0.0
        %592 = vmatprep.subr.mxu0 0.0
        %593 = vmatpush1.msra.mxu0 0.0
        %594 = vmatprep.subr.mxu0 0.0
        %595 = vmatpush1.msra.mxu0 0.0
        %596 = vmatprep.subr.mxu0 0.0
        %597 = vmatpush1.msra.mxu0 0.0
        %598 = vmatprep.subr.mxu0 0.0
        %599 = vmatpush1.msra.mxu0 0.0
        %600 = vmatprep.subr.mxu0 0.0
        %601 = vmatpush1.msra.mxu0 0.0
        %602 = vmatprep.subr.mxu0 0.0
        %603 = vmatpush1.msra.mxu0 %v574
        %604 = vmatprep.subr.mxu0 0.0
        %605 = vmatpush1.msra.mxu0 %v573
        %606 = vmatprep.subr.mxu0 0.0
        %607 = vmatpush1.msra.mxu0 %v572
        %608 = vmatprep.subr.mxu0 0.0
        %609 = vmatpush1.msra.mxu0 %v571
        %610 = vmatprep.subr.mxu0 0.0
        %611 = vmatpush2.msra.mxu0 0.0
        %612 = vmatprep.subr.mxu0 0.0
        %613 = vmatpush2.msra.mxu0 0.0
        %614 = vmatprep.subr.mxu0 0.0
        %615 = vmatpush2.msra.mxu0 0.0
        %616 = vmatprep.subr.mxu0 0.0
        %617 = vmatpush2.msra.mxu0 0.0
        %618 = vmatprep.subr.mxu0 0.0
        %619 = vmatpush2.msra.mxu0 0.0
        %620 = vmatprep.subr.mxu0 0.0
        %621 = vmatpush2.msra.mxu0 0.0
        %622 = vmatprep.subr.mxu0 0.0
        %623 = vmatpush2.msra.mxu0 0.0
        %624 = vmatprep.subr.mxu0 0.0
        %625 = vmatpush2.msra.mxu0 0.0
        %626 = vmatprep.subr.mxu0 0.0
        %627 = vmatpush2.msra.mxu0 0.0
        %628 = vmatprep.subr.mxu0 0.0
        %629 = vmatpush2.msra.mxu0 0.0
        %630 = vmatprep.subr.mxu0 0.0
        %631 = vmatpush2.msra.mxu0 0.0
        %632 = vmatprep.subr.mxu0 0.0
        %633 = vmatpush2.msra.mxu0 0.0
        %634 = vmatprep.subr.mxu0 0.0
        %635 = vmatpush2.msra.mxu0 0.0
        %636 = vmatprep.subr.mxu0 0.0
        %637 = vmatpush2.msra.mxu0 0.0
        %638 = vmatprep.subr.mxu0 0.0
        %639 = vmatpush2.msra.mxu0 0.0
        %640 = vmatprep.subr.mxu0 0.0
        %641 = vmatpush2.msra.mxu0 0.0
        %642 = vmatprep.mubr.f32.mxu0 0.0
        %643 = vmatmul.mubr.f32.gmra.mxu0 %v576
        %v644 = vpop.f32.mrf.mxu0
        %v645 = vadd.f32 0.0, %v644
        %v646 = vpop.f32.mrf.mxu0
        %647 = vdwg.mxu0
        %v648 = vlaneseq
        %v649 = vshrl.u32 %v648, 7
        %v650 = vlaneseq
        %v651 = vand.u32 %v650, 127
        %vm652 = vcmp.le.s32.totalorder %v651, %v649
        %654 = vrot.lane.b32.xlu0 %v645, 96
        %v655 = vpop.permute.xlu0 %654
        %vm656 = vcmask 64512
        %v657 = vsel %vm656, %v645, 0
        %v659 = vsel %vm656, %v655, 0
        %661 = vmatprep.subr.mxu0 0.0
        %662 = vmatpush1.xpose.msra.mxu0 0.0
        %663 = vmatprep.subr.mxu0 0.0
        %664 = vmatpush1.xpose.msra.mxu0 0.0
        %665 = vmatprep.subr.mxu0 0.0
        %666 = vmatpush1.xpose.msra.mxu0 0.0
        %667 = vmatprep.subr.mxu0 0.0
        %668 = vmatpush1.xpose.msra.mxu0 0.0
        %669 = vmatprep.subr.mxu0 0.0
        %670 = vmatpush1.xpose.msra.mxu0 0.0
        %671 = vmatprep.subr.mxu0 0.0
        %672 = vmatpush1.xpose.msra.mxu0 0.0
        %673 = vmatprep.subr.mxu0 0.0
        %674 = vmatpush1.xpose.msra.mxu0 0.0
        %675 = vmatprep.subr.mxu0 0.0
        %676 = vmatpush1.xpose.msra.mxu0 0.0
        %677 = vmatprep.subr.mxu0 0.0
        %678 = vmatpush1.xpose.msra.mxu0 0.0
        %679 = vmatprep.subr.mxu0 0.0
        %680 = vmatpush1.xpose.msra.mxu0 0.0
        %681 = vmatprep.subr.mxu0 0.0
        %682 = vmatpush1.xpose.msra.mxu0 0.0
        %683 = vmatprep.subr.mxu0 0.0
        %684 = vmatpush1.xpose.msra.mxu0 0.0
        %685 = vmatprep.subr.mxu0 0.0
        %686 = vmatpush1.xpose.msra.mxu0 0.0
        %687 = vmatprep.subr.mxu0 0.0
        %688 = vmatpush1.xpose.msra.mxu0 0.0
        %689 = vmatprep.subr.mxu0 0.0
        %690 = vmatpush1.xpose.msra.mxu0 0.0
        %691 = vmatprep.subr.mxu0 0.0
        %692 = vmatpush1.xpose.msra.mxu0 %v659
        %693 = vmatprep.subr.mxu0 0.0
        %694 = vmatpush2.xpose.msra.mxu0 0.0
        %695 = vmatprep.subr.mxu0 0.0
        %696 = vmatpush2.xpose.msra.mxu0 0.0
        %697 = vmatprep.subr.mxu0 0.0
        %698 = vmatpush2.xpose.msra.mxu0 0.0
        %699 = vmatprep.subr.mxu0 0.0
        %700 = vmatpush2.xpose.msra.mxu0 0.0
        %701 = vmatprep.subr.mxu0 0.0
        %702 = vmatpush2.xpose.msra.mxu0 0.0
        %703 = vmatprep.subr.mxu0 0.0
        %704 = vmatpush2.xpose.msra.mxu0 0.0
        %705 = vmatprep.subr.mxu0 0.0
        %706 = vmatpush2.xpose.msra.mxu0 0.0
        %707 = vmatprep.subr.mxu0 0.0
        %708 = vmatpush2.xpose.msra.mxu0 0.0
        %709 = vmatprep.subr.mxu0 0.0
        %710 = vmatpush2.xpose.msra.mxu0 0.0
        %711 = vmatprep.subr.mxu0 0.0
        %712 = vmatpush2.xpose.msra.mxu0 0.0
        %713 = vmatprep.subr.mxu0 0.0
        %714 = vmatpush2.xpose.msra.mxu0 0.0
        %715 = vmatprep.subr.mxu0 0.0
        %716 = vmatpush2.xpose.msra.mxu0 0.0
        %717 = vmatprep.subr.mxu0 0.0
        %718 = vmatpush2.xpose.msra.mxu0 0.0
        %719 = vmatprep.subr.mxu0 0.0
        %720 = vmatpush2.xpose.msra.mxu0 0.0
        %721 = vmatprep.subr.mxu0 0.0
        %722 = vmatpush2.xpose.msra.mxu0 0.0
        %723 = vmatprep.subr.mxu0 0.0
        %724 = vmatpush2.xpose.msra.mxu0 0.0
        %725 = vmatprep.mubr.f32.mxu0 0.0
        %726 = vmatmul.mubr.f32.gmra.mxu0 %v657
        %v727 = vpop.f32.mrf.mxu0
        %v728 = vadd.f32 0.0, %v727
        %v729 = vpop.f32.mrf.mxu0
        %730 = vdwg.mxu0
        %v731 = vmul.f32 %v728, 0.35355338
        %v732 = vsel %vm652, %v731, -1e+30
        %v733 = vsel %vm656, %v732, -inf
        %734 = vmax.xlane.f32.xlu0 %v733
        %v735 = vpop.xlane.xlu0 %734
        %v736 = vsub.f32 %v732, %v735
        %v737 = vmul.f32 %v736, 1.442695
        %v738 = vpow.pop %v737
        %v739 = vsel %vm656, %v738, 0.0
        %740 = vadd.xlane.f32.xlu0 %v739
        %v741 = vpop.xlane.xlu0 %740
        %v742 = vrcp.pop %v741
        %v743 = vmul.f32 %v738, %v742
        %744 = vrot.lane.b32.xlu0 %v645, 64
        %v745 = vpop.permute.xlu0 %744
        %v748 = vsel %vm656, %v743, 0
        %750 = vmatprep.subr.mxu0 0.0
        %751 = vmatpush1.msra.mxu0 0.0
        %752 = vmatprep.subr.mxu0 0.0
        %753 = vmatpush1.msra.mxu0 0.0
        %754 = vmatprep.subr.mxu0 0.0
        %755 = vmatpush1.msra.mxu0 0.0
        %756 = vmatprep.subr.mxu0 0.0
        %757 = vmatpush1.msra.mxu0 0.0
        %758 = vmatprep.subr.mxu0 0.0
        %759 = vmatpush1.msra.mxu0 0.0
        %760 = vmatprep.subr.mxu0 0.0
        %761 = vmatpush1.msra.mxu0 0.0
        %762 = vmatprep.subr.mxu0 0.0
        %763 = vmatpush1.msra.mxu0 0.0
        %764 = vmatprep.subr.mxu0 0.0
        %765 = vmatpush1.msra.mxu0 0.0
        %766 = vmatprep.subr.mxu0 0.0
        %767 = vmatpush1.msra.mxu0 0.0
        %768 = vmatprep.subr.mxu0 0.0
        %769 = vmatpush1.msra.mxu0 0.0
        %770 = vmatprep.subr.mxu0 0.0
        %771 = vmatpush1.msra.mxu0 0.0
        %772 = vmatprep.subr.mxu0 0.0
        %773 = vmatpush1.msra.mxu0 0.0
        %774 = vmatprep.subr.mxu0 0.0
        %775 = vmatpush1.msra.mxu0 0.0
        %776 = vmatprep.subr.mxu0 0.0
        %777 = vmatpush1.msra.mxu0 0.0
        %778 = vmatprep.subr.mxu0 0.0
        %779 = vmatpush1.msra.mxu0 0.0
        %780 = vmatprep.subr.mxu0 0.0
        %781 = vmatpush1.msra.mxu0 %v745
        %782 = vmatprep.subr.mxu0 0.0
        %783 = vmatpush2.msra.mxu0 0.0
        %784 = vmatprep.subr.mxu0 0.0
        %785 = vmatpush2.msra.mxu0 0.0
        %786 = vmatprep.subr.mxu0 0.0
        %787 = vmatpush2.msra.mxu0 0.0
        %788 = vmatprep.subr.mxu0 0.0
        %789 = vmatpush2.msra.mxu0 0.0
        %790 = vmatprep.subr.mxu0 0.0
        %791 = vmatpush2.msra.mxu0 0.0
        %792 = vmatprep.subr.mxu0 0.0
        %793 = vmatpush2.msra.mxu0 0.0
        %794 = vmatprep.subr.mxu0 0.0
        %795 = vmatpush2.msra.mxu0 0.0
        %796 = vmatprep.subr.mxu0 0.0
        %797 = vmatpush2.msra.mxu0 0.0
        %798 = vmatprep.subr.mxu0 0.0
        %799 = vmatpush2.msra.mxu0 0.0
        %800 = vmatprep.subr.mxu0 0.0
        %801 = vmatpush2.msra.mxu0 0.0
        %802 = vmatprep.subr.mxu0 0.0
        %803 = vmatpush2.msra.mxu0 0.0
        %804 = vmatprep.subr.mxu0 0.0
        %805 = vmatpush2.msra.mxu0 0.0
        %806 = vmatprep.subr.mxu0 0.0
        %807 = vmatpush2.msra.mxu0 0.0
        %808 = vmatprep.subr.mxu0 0.0
        %809 = vmatpush2.msra.mxu0 0.0
        %810 = vmatprep.subr.mxu0 0.0
        %811 = vmatpush2.msra.mxu0 0.0
        %812 = vmatprep.subr.mxu0 0.0
        %813 = vmatpush2.msra.mxu0 0.0
        %814 = vmatprep.mubr.f32.mxu0 0.0
        %815 = vmatmul.mubr.f32.gmra.mxu0 %v748
        %v816 = vpop.f32.mrf.mxu0
        %v817 = vadd.f32 0.0, %v816
        %v818 = vpop.f32.mrf.mxu0
        %819 = vdwg.mxu0
        %820 = vrot.lane.b32.xlu0 %v645, 120
        %v821 = vpop.permute.xlu0 %820
        %822 = vrot.lane.b32.xlu0 %v645, 88
        %v823 = vpop.permute.xlu0 %822
        %v824 = vsel %vm656, %v821, 0
        %v826 = vsel %vm656, %v823, 0
        %828 = vmatprep.subr.mxu0 0.0
        %829 = vmatpush1.xpose.msra.mxu0 0.0
        %830 = vmatprep.subr.mxu0 0.0
        %831 = vmatpush1.xpose.msra.mxu0 0.0
        %832 = vmatprep.subr.mxu0 0.0
        %833 = vmatpush1.xpose.msra.mxu0 0.0
        %834 = vmatprep.subr.mxu0 0.0
        %835 = vmatpush1.xpose.msra.mxu0 0.0
        %836 = vmatprep.subr.mxu0 0.0
        %837 = vmatpush1.xpose.msra.mxu0 0.0
        %838 = vmatprep.subr.mxu0 0.0
        %839 = vmatpush1.xpose.msra.mxu0 0.0
        %840 = vmatprep.subr.mxu0 0.0
        %841 = vmatpush1.xpose.msra.mxu0 0.0
        %842 = vmatprep.subr.mxu0 0.0
        %843 = vmatpush1.xpose.msra.mxu0 0.0
        %844 = vmatprep.subr.mxu0 0.0
        %845 = vmatpush1.xpose.msra.mxu0 0.0
        %846 = vmatprep.subr.mxu0 0.0
        %847 = vmatpush1.xpose.msra.mxu0 0.0
        %848 = vmatprep.subr.mxu0 0.0
        %849 = vmatpush1.xpose.msra.mxu0 0.0
        %850 = vmatprep.subr.mxu0 0.0
        %851 = vmatpush1.xpose.msra.mxu0 0.0
        %852 = vmatprep.subr.mxu0 0.0
        %853 = vmatpush1.xpose.msra.mxu0 0.0
        %854 = vmatprep.subr.mxu0 0.0
        %855 = vmatpush1.xpose.msra.mxu0 0.0
        %856 = vmatprep.subr.mxu0 0.0
        %857 = vmatpush1.xpose.msra.mxu0 0.0
        %858 = vmatprep.subr.mxu0 0.0
        %859 = vmatpush1.xpose.msra.mxu0 %v826
        %860 = vmatprep.subr.mxu0 0.0
        %861 = vmatpush2.xpose.msra.mxu0 0.0
        %862 = vmatprep.subr.mxu0 0.0
        %863 = vmatpush2.xpose.msra.mxu0 0.0
        %864 = vmatprep.subr.mxu0 0.0
        %865 = vmatpush2.xpose.msra.mxu0 0.0
        %866 = vmatprep.subr.mxu0 0.0
        %867 = vmatpush2.xpose.msra.mxu0 0.0
        %868 = vmatprep.subr.mxu0 0.0
        %869 = vmatpush2.xpose.msra.mxu0 0.0
        %870 = vmatprep.subr.mxu0 0.0
        %871 = vmatpush2.xpose.msra.mxu0 0.0
        %872 = vmatprep.subr.mxu0 0.0
        %873 = vmatpush2.xpose.msra.mxu0 0.0
        %874 = vmatprep.subr.mxu0 0.0
        %875 = vmatpush2.xpose.msra.mxu0 0.0
        %876 = vmatprep.subr.mxu0 0.0
        %877 = vmatpush2.xpose.msra.mxu0 0.0
        %878 = vmatprep.subr.mxu0 0.0
        %879 = vmatpush2.xpose.msra.mxu0 0.0
        %880 = vmatprep.subr.mxu0 0.0
        %881 = vmatpush2.xpose.msra.mxu0 0.0
        %882 = vmatprep.subr.mxu0 0.0
        %883 = vmatpush2.xpose.msra.mxu0 0.0
        %884 = vmatprep.subr.mxu0 0.0
        %885 = vmatpush2.xpose.msra.mxu0 0.0
        %886 = vmatprep.subr.mxu0 0.0
        %887 = vmatpush2.xpose.msra.mxu0 0.0
        %888 = vmatprep.subr.mxu0 0.0
        %889 = vmatpush2.xpose.msra.mxu0 0.0
        %890 = vmatprep.subr.mxu0 0.0
        %891 = vmatpush2.xpose.msra.mxu0 0.0
        %892 = vmatprep.mubr.f32.mxu0 0.0
        %893 = vmatmul.mubr.f32.gmra.mxu0 %v824
        %v894 = vpop.f32.mrf.mxu0
        %v895 = vadd.f32 0.0, %v894
        %v896 = vpop.f32.mrf.mxu0
        %897 = vdwg.mxu0
        %v898 = vmul.f32 %v895, 0.35355338
        %v899 = vsel %vm652, %v898, -1e+30
        %v900 = vsel %vm656, %v899, -inf
        %901 = vmax.xlane.f32.xlu0 %v900
        %v902 = vpop.xlane.xlu0 %901
        %v903 = vsub.f32 %v899, %v902
        %v904 = vmul.f32 %v903, 1.442695
        %v905 = vpow.pop %v904
        %v906 = vsel %vm656, %v905, 0.0
        %907 = vadd.xlane.f32.xlu0 %v906
        %v908 = vpop.xlane.xlu0 %907
        %v909 = vrcp.pop %v908
        %v910 = vmul.f32 %v905, %v909
        %911 = vrot.lane.b32.xlu0 %v645, 56
        %v912 = vpop.permute.xlu0 %911
        %v915 = vsel %vm656, %v910, 0
        %917 = vmatprep.subr.mxu0 0.0
        %918 = vmatpush1.msra.mxu0 0.0
        %919 = vmatprep.subr.mxu0 0.0
        %920 = vmatpush1.msra.mxu0 0.0
        %921 = vmatprep.subr.mxu0 0.0
        %922 = vmatpush1.msra.mxu0 0.0
        %923 = vmatprep.subr.mxu0 0.0
        %924 = vmatpush1.msra.mxu0 0.0
        %925 = vmatprep.subr.mxu0 0.0
        %926 = vmatpush1.msra.mxu0 0.0
        %927 = vmatprep.subr.mxu0 0.0
        %928 = vmatpush1.msra.mxu0 0.0
        %929 = vmatprep.subr.mxu0 0.0
        %930 = vmatpush1.msra.mxu0 0.0
        %931 = vmatprep.subr.mxu0 0.0
        %932 = vmatpush1.msra.mxu0 0.0
        %933 = vmatprep.subr.mxu0 0.0
        %934 = vmatpush1.msra.mxu0 0.0
        %935 = vmatprep.subr.mxu0 0.0
        %936 = vmatpush1.msra.mxu0 0.0
        %937 = vmatprep.subr.mxu0 0.0
        %938 = vmatpush1.msra.mxu0 0.0
        %939 = vmatprep.subr.mxu0 0.0
        %940 = vmatpush1.msra.mxu0 0.0
        %941 = vmatprep.subr.mxu0 0.0
        %942 = vmatpush1.msra.mxu0 0.0
        %943 = vmatprep.subr.mxu0 0.0
        %944 = vmatpush1.msra.mxu0 0.0
        %945 = vmatprep.subr.mxu0 0.0
        %946 = vmatpush1.msra.mxu0 0.0
        %947 = vmatprep.subr.mxu0 0.0
        %948 = vmatpush1.msra.mxu0 %v912
        %949 = vmatprep.subr.mxu0 0.0
        %950 = vmatpush2.msra.mxu0 0.0
        %951 = vmatprep.subr.mxu0 0.0
        %952 = vmatpush2.msra.mxu0 0.0
        %953 = vmatprep.subr.mxu0 0.0
        %954 = vmatpush2.msra.mxu0 0.0
        %955 = vmatprep.subr.mxu0 0.0
        %956 = vmatpush2.msra.mxu0 0.0
        %957 = vmatprep.subr.mxu0 0.0
        %958 = vmatpush2.msra.mxu0 0.0
        %959 = vmatprep.subr.mxu0 0.0
        %960 = vmatpush2.msra.mxu0 0.0
        %961 = vmatprep.subr.mxu0 0.0
        %962 = vmatpush2.msra.mxu0 0.0
        %963 = vmatprep.subr.mxu0 0.0
        %964 = vmatpush2.msra.mxu0 0.0
        %965 = vmatprep.subr.mxu0 0.0
        %966 = vmatpush2.msra.mxu0 0.0
        %967 = vmatprep.subr.mxu0 0.0
        %968 = vmatpush2.msra.mxu0 0.0
        %969 = vmatprep.subr.mxu0 0.0
        %970 = vmatpush2.msra.mxu0 0.0
        %971 = vmatprep.subr.mxu0 0.0
        %972 = vmatpush2.msra.mxu0 0.0
        %973 = vmatprep.subr.mxu0 0.0
        %974 = vmatpush2.msra.mxu0 0.0
        %975 = vmatprep.subr.mxu0 0.0
        %976 = vmatpush2.msra.mxu0 0.0
        %977 = vmatprep.subr.mxu0 0.0
        %978 = vmatpush2.msra.mxu0 0.0
        %979 = vmatprep.subr.mxu0 0.0
        %980 = vmatpush2.msra.mxu0 0.0
        %981 = vmatprep.mubr.f32.mxu0 0.0
        %982 = vmatmul.mubr.f32.gmra.mxu0 %v915
        %v983 = vpop.f32.mrf.mxu0
        %v984 = vadd.f32 0.0, %v983
        %v985 = vpop.f32.mrf.mxu0
        %986 = vdwg.mxu0
        %987 = vrot.lane.b32.xlu0 %v645, 112
        %v988 = vpop.permute.xlu0 %987
        %989 = vrot.lane.b32.xlu0 %v645, 80
        %v990 = vpop.permute.xlu0 %989
        %v991 = vsel %vm656, %v988, 0
        %v993 = vsel %vm656, %v990, 0
        %995 = vmatprep.subr.mxu0 0.0
        %996 = vmatpush1.xpose.msra.mxu0 0.0
        %997 = vmatprep.subr.mxu0 0.0
        %998 = vmatpush1.xpose.msra.mxu0 0.0
        %999 = vmatprep.subr.mxu0 0.0
        %1000 = vmatpush1.xpose.msra.mxu0 0.0
        %1001 = vmatprep.subr.mxu0 0.0
        %1002 = vmatpush1.xpose.msra.mxu0 0.0
        %1003 = vmatprep.subr.mxu0 0.0
        %1004 = vmatpush1.xpose.msra.mxu0 0.0
        %1005 = vmatprep.subr.mxu0 0.0
        %1006 = vmatpush1.xpose.msra.mxu0 0.0
        %1007 = vmatprep.subr.mxu0 0.0
        %1008 = vmatpush1.xpose.msra.mxu0 0.0
        %1009 = vmatprep.subr.mxu0 0.0
        %1010 = vmatpush1.xpose.msra.mxu0 0.0
        %1011 = vmatprep.subr.mxu0 0.0
        %1012 = vmatpush1.xpose.msra.mxu0 0.0
        %1013 = vmatprep.subr.mxu0 0.0
        %1014 = vmatpush1.xpose.msra.mxu0 0.0
        %1015 = vmatprep.subr.mxu0 0.0
        %1016 = vmatpush1.xpose.msra.mxu0 0.0
        %1017 = vmatprep.subr.mxu0 0.0
        %1018 = vmatpush1.xpose.msra.mxu0 0.0
        %1019 = vmatprep.subr.mxu0 0.0
        %1020 = vmatpush1.xpose.msra.mxu0 0.0
        %1021 = vmatprep.subr.mxu0 0.0
        %1022 = vmatpush1.xpose.msra.mxu0 0.0
        %1023 = vmatprep.subr.mxu0 0.0
        %1024 = vmatpush1.xpose.msra.mxu0 0.0
        %1025 = vmatprep.subr.mxu0 0.0
        %1026 = vmatpush1.xpose.msra.mxu0 %v993
        %1027 = vmatprep.subr.mxu0 0.0
        %1028 = vmatpush2.xpose.msra.mxu0 0.0
        %1029 = vmatprep.subr.mxu0 0.0
        %1030 = vmatpush2.xpose.msra.mxu0 0.0
        %1031 = vmatprep.subr.mxu0 0.0
        %1032 = vmatpush2.xpose.msra.mxu0 0.0
        %1033 = vmatprep.subr.mxu0 0.0
        %1034 = vmatpush2.xpose.msra.mxu0 0.0
        %1035 = vmatprep.subr.mxu0 0.0
        %1036 = vmatpush2.xpose.msra.mxu0 0.0
        %1037 = vmatprep.subr.mxu0 0.0
        %1038 = vmatpush2.xpose.msra.mxu0 0.0
        %1039 = vmatprep.subr.mxu0 0.0
        %1040 = vmatpush2.xpose.msra.mxu0 0.0
        %1041 = vmatprep.subr.mxu0 0.0
        %1042 = vmatpush2.xpose.msra.mxu0 0.0
        %1043 = vmatprep.subr.mxu0 0.0
        %1044 = vmatpush2.xpose.msra.mxu0 0.0
        %1045 = vmatprep.subr.mxu0 0.0
        %1046 = vmatpush2.xpose.msra.mxu0 0.0
        %1047 = vmatprep.subr.mxu0 0.0
        %1048 = vmatpush2.xpose.msra.mxu0 0.0
        %1049 = vmatprep.subr.mxu0 0.0
        %1050 = vmatpush2.xpose.msra.mxu0 0.0
        %1051 = vmatprep.subr.mxu0 0.0
        %1052 = vmatpush2.xpose.msra.mxu0 0.0
        %1053 = vmatprep.subr.mxu0 0.0
        %1054 = vmatpush2.xpose.msra.mxu0 0.0
        %1055 = vmatprep.subr.mxu0 0.0
        %1056 = vmatpush2.xpose.msra.mxu0 0.0
        %1057 = vmatprep.subr.mxu0 0.0
        %1058 = vmatpush2.xpose.msra.mxu0 0.0
        %1059 = vmatprep.mubr.f32.mxu0 0.0
        %1060 = vmatmul.mubr.f32.gmra.mxu0 %v991
        %v1061 = vpop.f32.mrf.mxu0
        %v1062 = vadd.f32 0.0, %v1061
        %v1063 = vpop.f32.mrf.mxu0
        %1064 = vdwg.mxu0
        %v1065 = vmul.f32 %v1062, 0.35355338
        %v1066 = vsel %vm652, %v1065, -1e+30
        %v1067 = vsel %vm656, %v1066, -inf
        %1068 = vmax.xlane.f32.xlu0 %v1067
        %v1069 = vpop.xlane.xlu0 %1068
        %v1070 = vsub.f32 %v1066, %v1069
        %v1071 = vmul.f32 %v1070, 1.442695
        %v1072 = vpow.pop %v1071
        %v1073 = vsel %vm656, %v1072, 0.0
        %1074 = vadd.xlane.f32.xlu0 %v1073
        %v1075 = vpop.xlane.xlu0 %1074
        %v1076 = vrcp.pop %v1075
        %v1077 = vmul.f32 %v1072, %v1076
        %1078 = vrot.lane.b32.xlu0 %v645, 48
        %v1079 = vpop.permute.xlu0 %1078
        %v1082 = vsel %vm656, %v1077, 0
        %1084 = vmatprep.subr.mxu0 0.0
        %1085 = vmatpush1.msra.mxu0 0.0
        %1086 = vmatprep.subr.mxu0 0.0
        %1087 = vmatpush1.msra.mxu0 0.0
        %1088 = vmatprep.subr.mxu0 0.0
        %1089 = vmatpush1.msra.mxu0 0.0
        %1090 = vmatprep.subr.mxu0 0.0
        %1091 = vmatpush1.msra.mxu0 0.0
        %1092 = vmatprep.subr.mxu0 0.0
        %1093 = vmatpush1.msra.mxu0 0.0
        %1094 = vmatprep.subr.mxu0 0.0
        %1095 = vmatpush1.msra.mxu0 0.0
        %1096 = vmatprep.subr.mxu0 0.0
        %1097 = vmatpush1.msra.mxu0 0.0
        %1098 = vmatprep.subr.mxu0 0.0
        %1099 = vmatpush1.msra.mxu0 0.0
        %1100 = vmatprep.subr.mxu0 0.0
        %1101 = vmatpush1.msra.mxu0 0.0
        %1102 = vmatprep.subr.mxu0 0.0
        %1103 = vmatpush1.msra.mxu0 0.0
        %1104 = vmatprep.subr.mxu0 0.0
        %1105 = vmatpush1.msra.mxu0 0.0
        %1106 = vmatprep.subr.mxu0 0.0
        %1107 = vmatpush1.msra.mxu0 0.0
        %1108 = vmatprep.subr.mxu0 0.0
        %1109 = vmatpush1.msra.mxu0 0.0
        %1110 = vmatprep.subr.mxu0 0.0
        %1111 = vmatpush1.msra.mxu0 0.0
        %1112 = vmatprep.subr.mxu0 0.0
        %1113 = vmatpush1.msra.mxu0 0.0
        %1114 = vmatprep.subr.mxu0 0.0
        %1115 = vmatpush1.msra.mxu0 %v1079
        %1116 = vmatprep.subr.mxu0 0.0
        %1117 = vmatpush2.msra.mxu0 0.0
        %1118 = vmatprep.subr.mxu0 0.0
        %1119 = vmatpush2.msra.mxu0 0.0
        %1120 = vmatprep.subr.mxu0 0.0
        %1121 = vmatpush2.msra.mxu0 0.0
        %1122 = vmatprep.subr.mxu0 0.0
        %1123 = vmatpush2.msra.mxu0 0.0
        %1124 = vmatprep.subr.mxu0 0.0
        %1125 = vmatpush2.msra.mxu0 0.0
        %1126 = vmatprep.subr.mxu0 0.0
        %1127 = vmatpush2.msra.mxu0 0.0
        %1128 = vmatprep.subr.mxu0 0.0
        %1129 = vmatpush2.msra.mxu0 0.0
        %1130 = vmatprep.subr.mxu0 0.0
        %1131 = vmatpush2.msra.mxu0 0.0
        %1132 = vmatprep.subr.mxu0 0.0
        %1133 = vmatpush2.msra.mxu0 0.0
        %1134 = vmatprep.subr.mxu0 0.0
        %1135 = vmatpush2.msra.mxu0 0.0
        %1136 = vmatprep.subr.mxu0 0.0
        %1137 = vmatpush2.msra.mxu0 0.0
        %1138 = vmatprep.subr.mxu0 0.0
        %1139 = vmatpush2.msra.mxu0 0.0
        %1140 = vmatprep.subr.mxu0 0.0
        %1141 = vmatpush2.msra.mxu0 0.0
        %1142 = vmatprep.subr.mxu0 0.0
        %1143 = vmatpush2.msra.mxu0 0.0
        %1144 = vmatprep.subr.mxu0 0.0
        %1145 = vmatpush2.msra.mxu0 0.0
        %1146 = vmatprep.subr.mxu0 0.0
        %1147 = vmatpush2.msra.mxu0 0.0
        %1148 = vmatprep.mubr.f32.mxu0 0.0
        %1149 = vmatmul.mubr.f32.gmra.mxu0 %v1082
        %v1150 = vpop.f32.mrf.mxu0
        %v1151 = vadd.f32 0.0, %v1150
        %v1152 = vpop.f32.mrf.mxu0
        %1153 = vdwg.mxu0
        %1154 = vrot.lane.b32.xlu0 %v645, 104
        %v1155 = vpop.permute.xlu0 %1154
        %1156 = vrot.lane.b32.xlu0 %v645, 72
        %v1157 = vpop.permute.xlu0 %1156
        %v1158 = vsel %vm656, %v1155, 0
        %v1160 = vsel %vm656, %v1157, 0
        %1162 = vmatprep.subr.mxu0 0.0
        %1163 = vmatpush1.xpose.msra.mxu0 0.0
        %1164 = vmatprep.subr.mxu0 0.0
        %1165 = vmatpush1.xpose.msra.mxu0 0.0
        %1166 = vmatprep.subr.mxu0 0.0
        %1167 = vmatpush1.xpose.msra.mxu0 0.0
        %1168 = vmatprep.subr.mxu0 0.0
        %1169 = vmatpush1.xpose.msra.mxu0 0.0
        %1170 = vmatprep.subr.mxu0 0.0
        %1171 = vmatpush1.xpose.msra.mxu0 0.0
        %1172 = vmatprep.subr.mxu0 0.0
        %1173 = vmatpush1.xpose.msra.mxu0 0.0
        %1174 = vmatprep.subr.mxu0 0.0
        %1175 = vmatpush1.xpose.msra.mxu0 0.0
        %1176 = vmatprep.subr.mxu0 0.0
        %1177 = vmatpush1.xpose.msra.mxu0 0.0
        %1178 = vmatprep.subr.mxu0 0.0
        %1179 = vmatpush1.xpose.msra.mxu0 0.0
        %1180 = vmatprep.subr.mxu0 0.0
        %1181 = vmatpush1.xpose.msra.mxu0 0.0
        %1182 = vmatprep.subr.mxu0 0.0
        %1183 = vmatpush1.xpose.msra.mxu0 0.0
        %1184 = vmatprep.subr.mxu0 0.0
        %1185 = vmatpush1.xpose.msra.mxu0 0.0
        %1186 = vmatprep.subr.mxu0 0.0
        %1187 = vmatpush1.xpose.msra.mxu0 0.0
        %1188 = vmatprep.subr.mxu0 0.0
        %1189 = vmatpush1.xpose.msra.mxu0 0.0
        %1190 = vmatprep.subr.mxu0 0.0
        %1191 = vmatpush1.xpose.msra.mxu0 0.0
        %1192 = vmatprep.subr.mxu0 0.0
        %1193 = vmatpush1.xpose.msra.mxu0 %v1160
        %1194 = vmatprep.subr.mxu0 0.0
        %1195 = vmatpush2.xpose.msra.mxu0 0.0
        %1196 = vmatprep.subr.mxu0 0.0
        %1197 = vmatpush2.xpose.msra.mxu0 0.0
        %1198 = vmatprep.subr.mxu0 0.0
        %1199 = vmatpush2.xpose.msra.mxu0 0.0
        %1200 = vmatprep.subr.mxu0 0.0
        %1201 = vmatpush2.xpose.msra.mxu0 0.0
        %1202 = vmatprep.subr.mxu0 0.0
        %1203 = vmatpush2.xpose.msra.mxu0 0.0
        %1204 = vmatprep.subr.mxu0 0.0
        %1205 = vmatpush2.xpose.msra.mxu0 0.0
        %1206 = vmatprep.subr.mxu0 0.0
        %1207 = vmatpush2.xpose.msra.mxu0 0.0
        %1208 = vmatprep.subr.mxu0 0.0
        %1209 = vmatpush2.xpose.msra.mxu0 0.0
        %1210 = vmatprep.subr.mxu0 0.0
        %1211 = vmatpush2.xpose.msra.mxu0 0.0
        %1212 = vmatprep.subr.mxu0 0.0
        %1213 = vmatpush2.xpose.msra.mxu0 0.0
        %1214 = vmatprep.subr.mxu0 0.0
        %1215 = vmatpush2.xpose.msra.mxu0 0.0
        %1216 = vmatprep.subr.mxu0 0.0
        %1217 = vmatpush2.xpose.msra.mxu0 0.0
        %1218 = vmatprep.subr.mxu0 0.0
        %1219 = vmatpush2.xpose.msra.mxu0 0.0
        %1220 = vmatprep.subr.mxu0 0.0
        %1221 = vmatpush2.xpose.msra.mxu0 0.0
        %1222 = vmatprep.subr.mxu0 0.0
        %1223 = vmatpush2.xpose.msra.mxu0 0.0
        %1224 = vmatprep.subr.mxu0 0.0
        %1225 = vmatpush2.xpose.msra.mxu0 0.0
        %1226 = vmatprep.mubr.f32.mxu0 0.0
        %1227 = vmatmul.mubr.f32.gmra.mxu0 %v1158
        %v1228 = vpop.f32.mrf.mxu0
        %v1229 = vadd.f32 0.0, %v1228
        %v1230 = vpop.f32.mrf.mxu0
        %1231 = vdwg.mxu0
        %v1232 = vmul.f32 %v1229, 0.35355338
        %v1233 = vsel %vm652, %v1232, -1e+30
        %v1234 = vsel %vm656, %v1233, -inf
        %1235 = vmax.xlane.f32.xlu0 %v1234
        %v1236 = vpop.xlane.xlu0 %1235
        %v1237 = vsub.f32 %v1233, %v1236
        %v1238 = vmul.f32 %v1237, 1.442695
        %v1239 = vpow.pop %v1238
        %v1240 = vsel %vm656, %v1239, 0.0
        %1241 = vadd.xlane.f32.xlu0 %v1240
        %v1242 = vpop.xlane.xlu0 %1241
        %v1243 = vrcp.pop %v1242
        %v1244 = vmul.f32 %v1239, %v1243
        %1245 = vrot.lane.b32.xlu0 %v645, 40
        %v1246 = vpop.permute.xlu0 %1245
        %v1249 = vsel %vm656, %v1244, 0
        %1251 = vmatprep.subr.mxu0 0.0
        %1252 = vmatpush1.msra.mxu0 0.0
        %1253 = vmatprep.subr.mxu0 0.0
        %1254 = vmatpush1.msra.mxu0 0.0
        %1255 = vmatprep.subr.mxu0 0.0
        %1256 = vmatpush1.msra.mxu0 0.0
        %1257 = vmatprep.subr.mxu0 0.0
        %1258 = vmatpush1.msra.mxu0 0.0
        %1259 = vmatprep.subr.mxu0 0.0
        %1260 = vmatpush1.msra.mxu0 0.0
        %1261 = vmatprep.subr.mxu0 0.0
        %1262 = vmatpush1.msra.mxu0 0.0
        %1263 = vmatprep.subr.mxu0 0.0
        %1264 = vmatpush1.msra.mxu0 0.0
        %1265 = vmatprep.subr.mxu0 0.0
        %1266 = vmatpush1.msra.mxu0 0.0
        %1267 = vmatprep.subr.mxu0 0.0
        %1268 = vmatpush1.msra.mxu0 0.0
        %1269 = vmatprep.subr.mxu0 0.0
        %1270 = vmatpush1.msra.mxu0 0.0
        %1271 = vmatprep.subr.mxu0 0.0
        %1272 = vmatpush1.msra.mxu0 0.0
        %1273 = vmatprep.subr.mxu0 0.0
        %1274 = vmatpush1.msra.mxu0 0.0
        %1275 = vmatprep.subr.mxu0 0.0
        %1276 = vmatpush1.msra.mxu0 0.0
        %1277 = vmatprep.subr.mxu0 0.0
        %1278 = vmatpush1.msra.mxu0 0.0
        %1279 = vmatprep.subr.mxu0 0.0
        %1280 = vmatpush1.msra.mxu0 0.0
        %1281 = vmatprep.subr.mxu0 0.0
        %1282 = vmatpush1.msra.mxu0 %v1246
        %1283 = vmatprep.subr.mxu0 0.0
        %1284 = vmatpush2.msra.mxu0 0.0
        %1285 = vmatprep.subr.mxu0 0.0
        %1286 = vmatpush2.msra.mxu0 0.0
        %1287 = vmatprep.subr.mxu0 0.0
        %1288 = vmatpush2.msra.mxu0 0.0
        %1289 = vmatprep.subr.mxu0 0.0
        %1290 = vmatpush2.msra.mxu0 0.0
        %1291 = vmatprep.subr.mxu0 0.0
        %1292 = vmatpush2.msra.mxu0 0.0
        %1293 = vmatprep.subr.mxu0 0.0
        %1294 = vmatpush2.msra.mxu0 0.0
        %1295 = vmatprep.subr.mxu0 0.0
        %1296 = vmatpush2.msra.mxu0 0.0
        %1297 = vmatprep.subr.mxu0 0.0
        %1298 = vmatpush2.msra.mxu0 0.0
        %1299 = vmatprep.subr.mxu0 0.0
        %1300 = vmatpush2.msra.mxu0 0.0
        %1301 = vmatprep.subr.mxu0 0.0
        %1302 = vmatpush2.msra.mxu0 0.0
        %1303 = vmatprep.subr.mxu0 0.0
        %1304 = vmatpush2.msra.mxu0 0.0
        %1305 = vmatprep.subr.mxu0 0.0
        %1306 = vmatpush2.msra.mxu0 0.0
        %1307 = vmatprep.subr.mxu0 0.0
        %1308 = vmatpush2.msra.mxu0 0.0
        %1309 = vmatprep.subr.mxu0 0.0
        %1310 = vmatpush2.msra.mxu0 0.0
        %1311 = vmatprep.subr.mxu0 0.0
        %1312 = vmatpush2.msra.mxu0 0.0
        %1313 = vmatprep.subr.mxu0 0.0
        %1314 = vmatpush2.msra.mxu0 0.0
        %1315 = vmatprep.mubr.f32.mxu0 0.0
        %1316 = vmatmul.mubr.f32.gmra.mxu0 %v1249
        %v1317 = vpop.f32.mrf.mxu0
        %v1318 = vadd.f32 0.0, %v1317
        %v1319 = vpop.f32.mrf.mxu0
        %1320 = vdwg.mxu0
        %1322 = vrot.lane.b32.xlu0 %v984, 8
        %v1323 = vpop.permute.xlu0 %1322
        %1326 = vrot.lane.b32.xlu0 %v1151, 16
        %v1327 = vpop.permute.xlu0 %1326
        %1330 = vrot.lane.b32.xlu0 %v1318, 24
        %v1331 = vpop.permute.xlu0 %1330
        %v1333 = vsel %vm656, %v817, %v1323
        %vm1334 = vcmask 130048
        %v1335 = vsel %vm1334, %v1333, %v1327
        %vm1336 = vcmask 195584
        %v1337 = vsel %vm1336, %v1335, %v1331
        %v1338 = vld [vmem:[%s450] sm:$0xff]
        %v1339 = vld [vmem:[%s450 + $0x8] sm:$0xff]
        %v1340 = vld [vmem:[%s450 + $0x10] sm:$0xff]
        %v1341 = vld [vmem:[%s450 + $0x18] sm:$0xff]
        %v1342 = vlaneseq
        %v1343 = vshrl.u32 %v1342, 7
        %v1344 = vsub.s32 4, %v1343
        %v1345 = vrot.slane %v544, %v1344
        %v1347 = vsel %vm546, %v1337, 0
        %1349 = vmatprep.subr.mxu0 0.0
        %1350 = vmatpush1.msra.mxu0 0.0
        %1351 = vmatprep.subr.mxu0 0.0
        %1352 = vmatpush1.msra.mxu0 0.0
        %1353 = vmatprep.subr.mxu0 0.0
        %1354 = vmatpush1.msra.mxu0 0.0
        %1355 = vmatprep.subr.mxu0 0.0
        %1356 = vmatpush1.msra.mxu0 0.0
        %1357 = vmatprep.subr.mxu0 0.0
        %1358 = vmatpush1.msra.mxu0 0.0
        %1359 = vmatprep.subr.mxu0 0.0
        %1360 = vmatpush1.msra.mxu0 0.0
        %1361 = vmatprep.subr.mxu0 0.0
        %1362 = vmatpush1.msra.mxu0 0.0
        %1363 = vmatprep.subr.mxu0 0.0
        %1364 = vmatpush1.msra.mxu0 0.0
        %1365 = vmatprep.subr.mxu0 0.0
        %1366 = vmatpush1.msra.mxu0 0.0
        %1367 = vmatprep.subr.mxu0 0.0
        %1368 = vmatpush1.msra.mxu0 0.0
        %1369 = vmatprep.subr.mxu0 0.0
        %1370 = vmatpush1.msra.mxu0 0.0
        %1371 = vmatprep.subr.mxu0 0.0
        %1372 = vmatpush1.msra.mxu0 0.0
        %1373 = vmatprep.subr.mxu0 0.0
        %1374 = vmatpush1.msra.mxu0 %v1341
        %1375 = vmatprep.subr.mxu0 0.0
        %1376 = vmatpush1.msra.mxu0 %v1340
        %1377 = vmatprep.subr.mxu0 0.0
        %1378 = vmatpush1.msra.mxu0 %v1339
        %1379 = vmatprep.subr.mxu0 0.0
        %1380 = vmatpush1.msra.mxu0 %v1338
        %1381 = vmatprep.subr.mxu0 0.0
        %1382 = vmatpush2.msra.mxu0 0.0
        %1383 = vmatprep.subr.mxu0 0.0
        %1384 = vmatpush2.msra.mxu0 0.0
        %1385 = vmatprep.subr.mxu0 0.0
        %1386 = vmatpush2.msra.mxu0 0.0
        %1387 = vmatprep.subr.mxu0 0.0
        %1388 = vmatpush2.msra.mxu0 0.0
        %1389 = vmatprep.subr.mxu0 0.0
        %1390 = vmatpush2.msra.mxu0 0.0
        %1391 = vmatprep.subr.mxu0 0.0
        %1392 = vmatpush2.msra.mxu0 0.0
        %1393 = vmatprep.subr.mxu0 0.0
        %1394 = vmatpush2.msra.mxu0 0.0
        %1395 = vmatprep.subr.mxu0 0.0
        %1396 = vmatpush2.msra.mxu0 0.0
        %1397 = vmatprep.subr.mxu0 0.0
        %1398 = vmatpush2.msra.mxu0 0.0
        %1399 = vmatprep.subr.mxu0 0.0
        %1400 = vmatpush2.msra.mxu0 0.0
        %1401 = vmatprep.subr.mxu0 0.0
        %1402 = vmatpush2.msra.mxu0 0.0
        %1403 = vmatprep.subr.mxu0 0.0
        %1404 = vmatpush2.msra.mxu0 0.0
        %1405 = vmatprep.subr.mxu0 0.0
        %1406 = vmatpush2.msra.mxu0 0.0
        %1407 = vmatprep.subr.mxu0 0.0
        %1408 = vmatpush2.msra.mxu0 0.0
        %1409 = vmatprep.subr.mxu0 0.0
        %1410 = vmatpush2.msra.mxu0 0.0
        %1411 = vmatprep.subr.mxu0 0.0
        %1412 = vmatpush2.msra.mxu0 0.0
        %1413 = vmatprep.mubr.f32.mxu0 0.0
        %1414 = vmatmul.mubr.f32.gmra.mxu0 %v1347
        %v1415 = vpop.f32.mrf.mxu0
        %v1416 = vadd.f32 %v1345, %v1415
        %v1417 = vpop.f32.mrf.mxu0
        %1418 = vdwg.mxu0
        %v1419 = vadd.f32 %v543, %v1416
        %v1420 = vsel %vm546, %v1419, 0.0
        %1421 = vadd.xlane.f32.xlu0 %v1420
        %v1422 = vpop.xlane.xlu0 %1421
        %v1423 = vmul.f32 %v1422, %v550
        %v1424 = vsub.f32 %v1419, %v1423
        %v1425 = vmul.f32 %v1424, %v1424
        %v1426 = vsel %vm546, %v1425, 0.0
        %1427 = vadd.xlane.f32.xlu0 %v1426
        %v1428 = vpop.xlane.xlu0 %1427
        %v1429 = vmul.f32 %v1428, %v550
        %v1430 = vadd.f32 %v1429, 1e-05
        %v1431 = vrsqrt.pop %v1430
        %v1432 = vmul.f32 %v1424, %v1431
        %v1433 = vlaneseq
        %v1434 = vshrl.u32 %v1433, 7
        %v1435 = vsub.s32 2, %v1434
        %v1436 = vrot.slane %v544, %v1435
        %v1437 = vmul.f32 %v1436, %v1432
        %v1438 = vlaneseq
        %v1439 = vshrl.u32 %v1438, 7
        %v1440 = vsub.s32 3, %v1439
        %v1441 = vrot.slane %v544, %v1440
        %v1442 = vadd.f32 %v1437, %v1441
        %v1443 = vld [vmem:[%s455] sm:$0xff]
        %v1444 = vld [vmem:[%s455 + $0x8] sm:$0xff]
        %v1445 = vld [vmem:[%s455 + $0x10] sm:$0xff]
        %v1446 = vld [vmem:[%s455 + $0x18] sm:$0xff]
        %v1448 = vlaneseq
        %v1449 = vshrl.u32 %v1448, 7
        %v1450 = vsub.s32 0, %v1449
        %v1451 = vrot.slane %v545, %v1450
        %v1454 = vsel %vm546, %v1442, 0
        %1456 = vmatprep.subr.mxu0 0.0
        %1457 = vmatpush1.msra.mxu0 0.0
        %1458 = vmatprep.subr.mxu0 0.0
        %1459 = vmatpush1.msra.mxu0 0.0
        %1460 = vmatprep.subr.mxu0 0.0
        %1461 = vmatpush1.msra.mxu0 0.0
        %1462 = vmatprep.subr.mxu0 0.0
        %1463 = vmatpush1.msra.mxu0 0.0
        %1464 = vmatprep.subr.mxu0 0.0
        %1465 = vmatpush1.msra.mxu0 0.0
        %1466 = vmatprep.subr.mxu0 0.0
        %1467 = vmatpush1.msra.mxu0 0.0
        %1468 = vmatprep.subr.mxu0 0.0
        %1469 = vmatpush1.msra.mxu0 0.0
        %1470 = vmatprep.subr.mxu0 0.0
        %1471 = vmatpush1.msra.mxu0 0.0
        %1472 = vmatprep.subr.mxu0 0.0
        %1473 = vmatpush1.msra.mxu0 0.0
        %1474 = vmatprep.subr.mxu0 0.0
        %1475 = vmatpush1.msra.mxu0 0.0
        %1476 = vmatprep.subr.mxu0 0.0
        %1477 = vmatpush1.msra.mxu0 0.0
        %1478 = vmatprep.subr.mxu0 0.0
        %1479 = vmatpush1.msra.mxu0 0.0
        %1480 = vmatprep.subr.mxu0 0.0
        %1481 = vmatpush1.msra.mxu0 %v1446
        %1482 = vmatprep.subr.mxu0 0.0
        %1483 = vmatpush1.msra.mxu0 %v1445
        %1484 = vmatprep.subr.mxu0 0.0
        %1485 = vmatpush1.msra.mxu0 %v1444
        %1486 = vmatprep.subr.mxu0 0.0
        %1487 = vmatpush1.msra.mxu0 %v1443
        %1488 = vmatprep.subr.mxu0 0.0
        %1489 = vmatpush2.msra.mxu0 0.0
        %1490 = vmatprep.subr.mxu0 0.0
        %1491 = vmatpush2.msra.mxu0 0.0
        %1492 = vmatprep.subr.mxu0 0.0
        %1493 = vmatpush2.msra.mxu0 0.0
        %1494 = vmatprep.subr.mxu0 0.0
        %1495 = vmatpush2.msra.mxu0 0.0
        %1496 = vmatprep.subr.mxu0 0.0
        %1497 = vmatpush2.msra.mxu0 0.0
        %1498 = vmatprep.subr.mxu0 0.0
        %1499 = vmatpush2.msra.mxu0 0.0
        %1500 = vmatprep.subr.mxu0 0.0
        %1501 = vmatpush2.msra.mxu0 0.0
        %1502 = vmatprep.subr.mxu0 0.0
        %1503 = vmatpush2.msra.mxu0 0.0
        %1504 = vmatprep.subr.mxu0 0.0
        %1505 = vmatpush2.msra.mxu0 0.0
        %1506 = vmatprep.subr.mxu0 0.0
        %1507 = vmatpush2.msra.mxu0 0.0
        %1508 = vmatprep.subr.mxu0 0.0
        %1509 = vmatpush2.msra.mxu0 0.0
        %1510 = vmatprep.subr.mxu0 0.0
        %1511 = vmatpush2.msra.mxu0 0.0
        %1512 = vmatprep.subr.mxu0 0.0
        %1513 = vmatpush2.msra.mxu0 0.0
        %1514 = vmatprep.subr.mxu0 0.0
        %1515 = vmatpush2.msra.mxu0 0.0
        %1516 = vmatprep.subr.mxu0 0.0
        %1517 = vmatpush2.msra.mxu0 0.0
        %1518 = vmatprep.subr.mxu0 0.0
        %1519 = vmatpush2.msra.mxu0 0.0
        %1520 = vmatprep.mubr.f32.mxu0 0.0
        %1521 = vmatmul.mubr.f32.gmra.mxu0 %v1454
        %v1522 = vpop.f32.mrf.mxu0
        %v1523 = vadd.f32 %v1451, %v1522
        %v1524 = vpop.f32.mrf.mxu0
        %1525 = vdwg.mxu0
        %v1526 = vmul.f32 %v1523, 0.5
        %v1527 = vmul.f32 %v1523, %v1523
        %v1528 = vmul.f32 %v1523, %v1527
        %v1529 = vmul.f32 %v1528, 0.044715
        %v1530 = vadd.f32 %v1523, %v1529
        %v1531 = vmul.f32 %v1530, 0.7978845
        %v1532 = vtanh.pop %v1531
        %v1533 = vadd.f32 %v1532, 1.0
        %v1534 = vmul.f32 %v1526, %v1533
        %v1535 = vld [vmem:[%s460] sm:$0xff]
        %v1536 = vld [vmem:[%s460 + $0x8] sm:$0xff]
        %v1537 = vld [vmem:[%s460 + $0x10] sm:$0xff]
        %v1538 = vld [vmem:[%s460 + $0x18] sm:$0xff]
        %v1539 = vld [vmem:[%s460 + $0x20] sm:$0xff]
        %v1540 = vld [vmem:[%s460 + $0x28] sm:$0xff]
        %v1541 = vld [vmem:[%s460 + $0x30] sm:$0xff]
        %v1542 = vld [vmem:[%s460 + $0x38] sm:$0xff]
        %v1543 = vld [vmem:[%s460 + $0x40] sm:$0xff]
        %v1544 = vld [vmem:[%s460 + $0x48] sm:$0xff]
        %v1545 = vld [vmem:[%s460 + $0x50] sm:$0xff]
        %v1546 = vld [vmem:[%s460 + $0x58] sm:$0xff]
        %v1547 = vld [vmem:[%s460 + $0x60] sm:$0xff]
        %v1548 = vld [vmem:[%s460 + $0x68] sm:$0xff]
        %v1549 = vld [vmem:[%s460 + $0x70] sm:$0xff]
        %v1550 = vld [vmem:[%s460 + $0x78] sm:$0xff]
        %v1551 = vlaneseq
        %v1552 = vshrl.u32 %v1551, 7
        %v1553 = vsub.s32 5, %v1552
        %v1554 = vrot.slane %v544, %v1553
        %1555 = vmatprep.subr.mxu0 0.0
        %1556 = vmatpush1.msra.mxu0 %v1550
        %1557 = vmatprep.subr.mxu0 0.0
        %1558 = vmatpush1.msra.mxu0 %v1549
        %1559 = vmatprep.subr.mxu0 0.0
        %1560 = vmatpush1.msra.mxu0 %v1548
        %1561 = vmatprep.subr.mxu0 0.0
        %1562 = vmatpush1.msra.mxu0 %v1547
        %1563 = vmatprep.subr.mxu0 0.0
        %1564 = vmatpush1.msra.mxu0 %v1546
        %1565 = vmatprep.subr.mxu0 0.0
        %1566 = vmatpush1.msra.mxu0 %v1545
        %1567 = vmatprep.subr.mxu0 0.0
        %1568 = vmatpush1.msra.mxu0 %v1544
        %1569 = vmatprep.subr.mxu0 0.0
        %1570 = vmatpush1.msra.mxu0 %v1543
        %1571 = vmatprep.subr.mxu0 0.0
        %1572 = vmatpush1.msra.mxu0 %v1542
        %1573 = vmatprep.subr.mxu0 0.0
        %1574 = vmatpush1.msra.mxu0 %v1541
        %1575 = vmatprep.subr.mxu0 0.0
        %1576 = vmatpush1.msra.mxu0 %v1540
        %1577 = vmatprep.subr.mxu0 0.0
        %1578 = vmatpush1.msra.mxu0 %v1539
        %1579 = vmatprep.subr.mxu0 0.0
        %1580 = vmatpush1.msra.mxu0 %v1538
        %1581 = vmatprep.subr.mxu0 0.0
        %1582 = vmatpush1.msra.mxu0 %v1537
        %1583 = vmatprep.subr.mxu0 0.0
        %1584 = vmatpush1.msra.mxu0 %v1536
        %1585 = vmatprep.subr.mxu0 0.0
        %1586 = vmatpush1.msra.mxu0 %v1535
        %1587 = vmatprep.subr.mxu0 0.0
        %1588 = vmatpush2.msra.mxu0 0.0
        %1589 = vmatprep.subr.mxu0 0.0
        %1590 = vmatpush2.msra.mxu0 0.0
        %1591 = vmatprep.subr.mxu0 0.0
        %1592 = vmatpush2.msra.mxu0 0.0
        %1593 = vmatprep.subr.mxu0 0.0
        %1594 = vmatpush2.msra.mxu0 0.0
        %1595 = vmatprep.subr.mxu0 0.0
        %1596 = vmatpush2.msra.mxu0 0.0
        %1597 = vmatprep.subr.mxu0 0.0
        %1598 = vmatpush2.msra.mxu0 0.0
        %1599 = vmatprep.subr.mxu0 0.0
        %1600 = vmatpush2.msra.mxu0 0.0
        %1601 = vmatprep.subr.mxu0 0.0
        %1602 = vmatpush2.msra.mxu0 0.0
        %1603 = vmatprep.subr.mxu0 0.0
        %1604 = vmatpush2.msra.mxu0 0.0
        %1605 = vmatprep.subr.mxu0 0.0
        %1606 = vmatpush2.msra.mxu0 0.0
        %1607 = vmatprep.subr.mxu0 0.0
        %1608 = vmatpush2.msra.mxu0 0.0
        %1609 = vmatprep.subr.mxu0 0.0
        %1610 = vmatpush2.msra.mxu0 0.0
        %1611 = vmatprep.subr.mxu0 0.0
        %1612 = vmatpush2.msra.mxu0 0.0
        %1613 = vmatprep.subr.mxu0 0.0
        %1614 = vmatpush2.msra.mxu0 0.0
        %1615 = vmatprep.subr.mxu0 0.0
        %1616 = vmatpush2.msra.mxu0 0.0
        %1617 = vmatprep.subr.mxu0 0.0
        %1618 = vmatpush2.msra.mxu0 0.0
        %1619 = vmatprep.mubr.f32.mxu0 0.0
        %1620 = vmatmul.mubr.f32.gmra.mxu0 %v1534
        %v1621 = vpop.f32.mrf.mxu0
        %v1622 = vadd.f32 %v1554, %v1621
        %v1623 = vpop.f32.mrf.mxu0
        %1624 = vdwg.mxu0
        %v1625 = vadd.f32 %v1419, %v1622
        %1626 = vst.msk [vmem:[#allocation2] sm:$0xff] %vm546, %v1625
        %p1627 = scmp.eq.s32.totalorder %s36, 1
        // Predicated region
        $region65: #{tpu_custom_call.1} parent=59 // pred_check
          %p1628 = pneg %p1627
        $region66: #{tpu_custom_call.1} parent=59 // pred_check_branch
          %1630 = sbr.rel (%p1628) target = $region68
        $region67: #{tpu_custom_call.1} parent=59 // pred_region
          %v1631 = vld [vmem:[%s9] sm:$0x3]
          %v1632 = vld [vmem:[#allocation2] sm:$0xff]
          %v1633 = vsel %vm546, %v1632, 0.0
          %1634 = vadd.xlane.f32.xlu0 %v1633
          %v1635 = vpop.xlane.xlu0 %1634
          %v1636 = vmul.f32 %v1635, %v550
          %v1637 = vsub.f32 %v1632, %v1636
          %v1638 = vmul.f32 %v1637, %v1637
          %v1639 = vsel %vm546, %v1638, 0.0
          %1640 = vadd.xlane.f32.xlu0 %v1639
          %v1641 = vpop.xlane.xlu0 %1640
          %v1642 = vmul.f32 %v1641, %v550
          %v1643 = vadd.f32 %v1642, 1e-05
          %v1644 = vrsqrt.pop %v1643
          %v1645 = vmul.f32 %v1637, %v1644
          %v1646 = vlaneseq
          %v1647 = vshrl.u32 %v1646, 7
          %v1648 = vsub.s32 0, %v1647
          %v1649 = vrot.slane %v1631, %v1648
          %v1650 = vmul.f32 %v1649, %v1645
          %v1651 = vlaneseq
          %v1652 = vshrl.u32 %v1651, 7
          %v1653 = vsub.s32 1, %v1652
          %v1654 = vrot.slane %v1631, %v1653
          %v1655 = vadd.f32 %v1650, %v1654
          %v1656 = vld [vmem:[%s10] sm:$0xff]
          %v1657 = vld [vmem:[%s10 + $0x8] sm:$0xff]
          %v1658 = vld [vmem:[%s10 + $0x10] sm:$0xff]
          %v1659 = vld [vmem:[%s10 + $0x18] sm:$0xff]
          %v1660 = vld [vmem:[%s10 + $0x20] sm:$0xff]
          %v1661 = vld [vmem:[%s10 + $0x28] sm:$0xff]
          %v1662 = vld [vmem:[%s10 + $0x30] sm:$0xff]
          %v1663 = vld [vmem:[%s10 + $0x38] sm:$0xff]
          %v1665 = vsel %vm546, %v1655, 0
          %1667 = vmatprep.subr.mxu0 0.0
          %1668 = vmatpush1.msra.mxu0 0.0
          %1669 = vmatprep.subr.mxu0 0.0
          %1670 = vmatpush1.msra.mxu0 0.0
          %1671 = vmatprep.subr.mxu0 0.0
          %1672 = vmatpush1.msra.mxu0 0.0
          %1673 = vmatprep.subr.mxu0 0.0
          %1674 = vmatpush1.msra.mxu0 0.0
          %1675 = vmatprep.subr.mxu0 0.0
          %1676 = vmatpush1.msra.mxu0 0.0
          %1677 = vmatprep.subr.mxu0 0.0
          %1678 = vmatpush1.msra.mxu0 0.0
          %1679 = vmatprep.subr.mxu0 0.0
          %1680 = vmatpush1.msra.mxu0 0.0
          %1681 = vmatprep.subr.mxu0 0.0
          %1682 = vmatpush1.msra.mxu0 0.0
          %1683 = vmatprep.subr.mxu0 0.0
          %1684 = vmatpush1.msra.mxu0 0.0
          %1685 = vmatprep.subr.mxu0 0.0
          %1686 = vmatpush1.msra.mxu0 0.0
          %1687 = vmatprep.subr.mxu0 0.0
          %1688 = vmatpush1.msra.mxu0 0.0
          %1689 = vmatprep.subr.mxu0 0.0
          %1690 = vmatpush1.msra.mxu0 0.0
          %1691 = vmatprep.subr.mxu0 %v1663
          %1692 = vmatpush1.msra.mxu0 %v1662
          %1693 = vmatprep.subr.mxu0 %v1661
          %1694 = vmatpush1.msra.mxu0 %v1660
          %1695 = vmatprep.subr.mxu0 %v1659
          %1696 = vmatpush1.msra.mxu0 %v1658
          %1697 = vmatprep.subr.mxu0 %v1657
          %1698 = vmatpush1.msra.mxu0 %v1656
          %1699 = vmatprep.subr.mxu0 0.0
          %1700 = vmatpush2.msra.mxu0 0.0
          %1701 = vmatprep.subr.mxu0 0.0
          %1702 = vmatpush2.msra.mxu0 0.0
          %1703 = vmatprep.subr.mxu0 0.0
          %1704 = vmatpush2.msra.mxu0 0.0
          %1705 = vmatprep.subr.mxu0 0.0
          %1706 = vmatpush2.msra.mxu0 0.0
          %1707 = vmatprep.subr.mxu0 0.0
          %1708 = vmatpush2.msra.mxu0 0.0
          %1709 = vmatprep.subr.mxu0 0.0
          %1710 = vmatpush2.msra.mxu0 0.0
          %1711 = vmatprep.subr.mxu0 0.0
          %1712 = vmatpush2.msra.mxu0 0.0
          %1713 = vmatprep.subr.mxu0 0.0
          %1714 = vmatpush2.msra.mxu0 0.0
          %1715 = vmatprep.subr.mxu0 0.0
          %1716 = vmatpush2.msra.mxu0 0.0
          %1717 = vmatprep.subr.mxu0 0.0
          %1718 = vmatpush2.msra.mxu0 0.0
          %1719 = vmatprep.subr.mxu0 0.0
          %1720 = vmatpush2.msra.mxu0 0.0
          %1721 = vmatprep.subr.mxu0 0.0
          %1722 = vmatpush2.msra.mxu0 0.0
          %1723 = vmatprep.subr.mxu0 0.0
          %1724 = vmatpush2.msra.mxu0 0.0
          %1725 = vmatprep.subr.mxu0 0.0
          %1726 = vmatpush2.msra.mxu0 0.0
          %1727 = vmatprep.subr.mxu0 0.0
          %1728 = vmatpush2.msra.mxu0 0.0
          %1729 = vmatprep.subr.mxu0 0.0
          %1730 = vmatpush2.msra.mxu0 0.0
          %1731 = vmatprep.mubr.f32.mxu0 0.0
          %1732 = vmatmul.mubr.f32.gmra.mxu0 %v1665
          %v1733 = vpop.f32.mrf.mxu0
          %v1734 = vadd.f32 0.0, %v1733
          %v1735 = vpop.f32.mrf.mxu0
          %v1736 = vadd.f32 0.0, %v1735
          %1737 = vdwg.mxu0
          %1738 = vst [vmem:[%s440] sm:$0xff] %v1734
          %1739 = vst [vmem:[%s440 + $0x8] sm:$0xff] %v1736
        $region68: #{tpu_custom_call.1} parent=59 // pred_fallthru
          _
        %s1740 = sand.u32 %s291, 1
        %s1741 = scalar_lea.sflag [#allocation6], %s1740
        %s1742 = sand.u32 %s291, 1
        %s1743 = smul.addr %s1742, 16
        %s1744 = scalar_lea.vmem [#allocation5], %s1743
        // Predicated region
        $region69: #{tpu_custom_call.1} parent=59 // pred_check
          %p1745 = pneg %p301
        $region70: #{tpu_custom_call.1} parent=59 // pred_check_branch
          %1747 = sbr.rel (%p1745) target = $region72
        $region71: #{tpu_custom_call.1} parent=59 // pred_region
          %s1749 = ssub.s32 256, 256
          %1750 = vsyncadd %s1741, %s1749
          %s1751 = smul.addr %s35, 2
          %s1752 = smul.addr %s1751, 128
          %s1753 = scalar_lea.hbm %s11, %s1752
          %s1755 = sshll.u32 %s1744, 4
          %s1756 = int_to_ptr.vmem [resolvable:$true] %s1755
          %1758 = dma.vmem_to_hbm [thread:$0]  %s1756, 256, %s1753, %s1741
        $region72: #{tpu_custom_call.1} parent=59 // pred_fallthru
          _
      $region60: #{tpu_custom_call.1} parent=5 // pred_fallthru
        _
      %p1759 = scmp.le.s32.totalorder 2, %s26
      // Predicated region
      $region73: #{tpu_custom_call.1} parent=5 // pred_check
        %p1760 = pneg %p1759
      $region74: #{tpu_custom_call.1} parent=5 // pred_check_branch
        %1762 = sbr.rel (%p1760) target = $region76
      $region75: #{tpu_custom_call.1} parent=5 // pred_region
        %s1763 = ssub.s32 %s26, 2
        // Predicated region
        $region77: #{tpu_custom_call.1} parent=75 // pred_check
          %p1764 = pneg %p307
        $region78: #{tpu_custom_call.1} parent=75 // pred_check_branch
          %1766 = sbr.rel (%p1764) target = $region80
        $region79: #{tpu_custom_call.1} parent=75 // pred_region
          %s1767 = sand.u32 %s292, 1
          %s1768 = scalar_lea.sflag [#allocation6], %s1767
          %s1769 = sand.u32 %s292, 1
          %s1770 = smul.addr %s1769, 16
          %s1771 = scalar_lea.vmem [#allocation5], %s1770
          %1772 = dma.done %s1768, 256
        $region80: #{tpu_custom_call.1} parent=75 // pred_fallthru
          _
      $region76: #{tpu_custom_call.1} parent=5 // pred_fallthru
        _
    $region6: #{tpu_custom_call.1} parent=1 // loop_footer
      %s30 = sadd.s32 1, %s26
    $region7: #{tpu_custom_call.1} parent=1 // loop_footer_branch
      %25 = sbr.rel target = $region3
    $region8: #{tpu_custom_call.1} parent=1 // loop_exit
      _
    %1773 = vsyncpa [#allocation6], 1
    %s1774 = scalar_lea.sflag [#allocation6], 1
    %1775 = vsyncpa %s1774, 1

</llo_original>
